<compile_context>
chip_gen: v7x
topology: tpu7x:2x2x1
jax: 0.10.0
libtpu: 0.0.40
codegen_flags: <defaults>
</compile_context>

<pallas_src>
import functools

import jax
import jax.numpy as jnp
from jax.experimental import pallas as pl
from jax.experimental.pallas import tpu as pltpu


def _round_up(x, m):
    return ((x + m - 1) // m) * m


def _cdiv(a, b):
    return (a + b - 1) // b


# ---------------------------------------------------------------------------
# Per-generation configuration (roofline-driven tiles + VMEM budget).
# ---------------------------------------------------------------------------
def _tpu_kind():
    try:
        return jax.devices()[0].device_kind.lower()
    except Exception:
        return ""


def _physical_vmem_bytes(kind):
    try:
        return int(pltpu.get_tpu_info().vmem_capacity_bytes)
    except Exception:
        pass
    if "v7" in kind or "7x" in kind:
        return 64 << 20
    return 128 << 20


def _legalize_ti(ti, inter):
    """Largest ti' <= ti that is a multiple of 256 (then 128) and divides inter.

    Never falls back to a full (H, I) weight chunk unless I itself is tiny /
    not a multiple of 128 (fixes the previous VMEM blow-up fallback).
    """
    ti = min(ti, inter)
    for step in (256, 128):  # prefer full MXU width (2x256x256 on v6e/v7x)
        cand = (ti // step) * step
        while cand >= step:
            if inter % cand == 0:
                return cand
            cand -= step
    return inter  # irregular / tiny intermediate size: single chunk


def select_mlp_config(intermediate_size):
    """Pick (tm, ti, vmem_limit_bytes, n_cores) for the current TPU generation."""
    kind = _tpu_kind()
    if "v7" in kind or "7x" in kind:
        # v7x: only 64 MiB VMEM per TensorCore, ridge ~310 FLOP/byte, 2 TCs/chip.
        tm, ti, target_vmem, n_cores = 512, 256, 56 << 20, 2
    elif "v6" in kind:
        # v6e: ridge ~650 FLOP/byte -> large token tiles; 128 MiB physical VMEM.
        tm, ti, target_vmem, n_cores = 768, 512, 104 << 20, 1
    elif "v5p" in kind:
        # v5p: megacore (2 TCs), plenty of VMEM.
        tm, ti, target_vmem, n_cores = 512, 512, 100 << 20, 2
    elif "v5" in kind:
        # v5e: ridge ~240 FLOP/byte -> tm=256 is already ~compute-bound.
        tm, ti, target_vmem, n_cores = 256, 512, 100 << 20, 1
    else:
        # Unknown generation: conservative defaults, compiler-default VMEM cap.
        tm, ti, target_vmem, n_cores = 256, 256, None, 1

    vmem_limit = None
    if target_vmem is not None:
        phys = _physical_vmem_bytes(kind)
        vmem_limit = min(target_vmem, phys - (8 << 20))
        if vmem_limit <= 0:
            vmem_limit = None

    ti = _legalize_ti(ti, intermediate_size)
    return tm, ti, vmem_limit, n_cores


# ---------------------------------------------------------------------------
# One-time weight preparation (outside the per-call hot path).
# ---------------------------------------------------------------------------
def prepare_fused_mlp_weights(w_gate_up, w_down, ti):
    """Split / transpose / interleave weights once.

    w_gate_up: [2*I, H]  (MergedColumnParallel layout: gate rows, then up rows)
    w_down:    [H, I]    (RowParallel layout)
    ti:        intermediate chunk width (from select_mlp_config)

    Returns:
      w_gu_t:   [H, 2*I]  interleaved so column block k (width 2*ti) is
                [gate chunk k | up chunk k]  -> one DMA + one MXU matmul / step
      w_down_t: [I, H]
    """
    two_i, hidden = w_gate_up.shape
    inter = two_i // 2
    assert inter % ti == 0, f"ti={ti} must divide intermediate_size={inter}"
    nk = inter // ti
    w_gate_t = jnp.transpose(w_gate_up[:inter])   # (H, I)
    w_up_t = jnp.transpose(w_gate_up[inter:])     # (H, I)
    w_gu_t = jnp.concatenate(
        [w_gate_t.reshape(hidden, nk, ti), w_up_t.reshape(hidden, nk, ti)],
        axis=-1,
    ).reshape(hidden, 2 * inter)
    w_down_t = jnp.transpose(w_down)              # (I, H)
    return w_gu_t, w_down_t


# ---------------------------------------------------------------------------
# Kernel
# ---------------------------------------------------------------------------
def _fused_mlp_kernel(x_ref, wgu_ref, wd_ref, o_ref, acc_ref, *, ti):
    """One (token-tile i, intermediate-chunk k) step.

    x_ref:   (tm, H)     activation tile (resident across the k axis)
    wgu_ref: (H, 2*ti)   merged [gate_k | up_k] weight chunk
    wd_ref:  (ti, H)     down-projection weight chunk
    o_ref:   (tm, H)     output tile (written once, at the last k step)
    acc_ref: (tm, H)     resident f32 accumulator
    """
    k = pl.program_id(1)

    @pl.when(k == 0)
    def _():
        acc_ref[...] = jnp.zeros_like(acc_ref)

    # Single MXU pass produces gate and up for this chunk: (tm, 2*ti) f32.
    gu = jnp.dot(x_ref[...], wgu_ref[...], preferred_element_type=jnp.float32)
    gate = gu[:, :ti]          # lane-aligned slice (ti is a multiple of 128)
    up = gu[:, ti:]

    # SiluAndMul on this chunk (sigmoid runs on the EUP, mul on the VPU).
    h = (gate * jax.nn.sigmoid(gate)) * up

    # Partial down projection, accumulated into the resident f32 accumulator.
    acc_ref[...] += jnp.dot(h.astype(wd_ref.dtype), wd_ref[...],
                            preferred_element_type=jnp.float32)

    @pl.when(k == pl.num_programs(1) - 1)
    def _():
        o_ref[...] = acc_ref[...].astype(o_ref.dtype)


def _vmem_working_set_bytes(tm, ti, hidden, act_bytes, w_bytes):
    x_b = 2 * tm * hidden * act_bytes           # double-buffered x tile
    o_b = 2 * tm * hidden * act_bytes           # double-buffered out tile
    acc_b = tm * hidden * 4                     # resident f32 accumulator
    wgu_b = 2 * hidden * 2 * ti * w_bytes       # double-buffered [gate|up] chunk
    wd_b = 2 * ti * hidden * w_bytes            # double-buffered down chunk
    return x_b + o_b + acc_b + wgu_b + wd_b


@functools.partial(jax.jit,
                   static_argnames=("tm", "ti", "vmem_limit_bytes", "n_cores"))
def fused_mlp(x, w_gu_t, w_down_t, *, tm, ti, vmem_limit_bytes=None, n_cores=1):
    """x: [T, H]; w_gu_t: [H, 2*I] (interleaved); w_down_t: [I, H]."""
    T, hidden = x.shape
    inter = w_down_t.shape[0]
    assert w_gu_t.shape == (hidden, 2 * inter)
    assert inter % ti == 0

    # --- token-tile legalization -----------------------------------------
    # Multiples of 16 (bf16 sublane packing); never larger than (padded) T.
    tm = max(16, min(_round_up(tm, 16), _round_up(T, 16)))
    # On 2-TensorCore chips make sure grid dim 0 >= n_cores so no core idles
    # for decode-shaped T.
    if n_cores > 1 and T > 16:
        tm = min(tm, _round_up(_cdiv(T, n_cores), 16))
    # Shrink tm until the working set fits the VMEM budget (odd-shape guard).
    budget = (vmem_limit_bytes if vmem_limit_bytes else (64 << 20)) - (4 << 20)
    while (tm > 16 and
           _vmem_working_set_bytes(tm, ti, hidden, x.dtype.itemsize,
                                   w_gu_t.dtype.itemsize) > budget):
        tm = max(16, _round_up(tm // 2, 16))

    # Pad tokens so they divide evenly into tiles (zero rows -> zero outputs).
    Tp = _round_up(T, tm)
    xp = x if Tp == T else jnp.pad(x, ((0, Tp - T), (0, 0)))

    n_tok_tiles = Tp // tm
    n_k = inter // ti
    w_bytes = w_gu_t.dtype.itemsize

    cost = pl.CostEstimate(
        flops=6 * Tp * hidden * inter,                         # 2 matmul passes
        transcendentals=Tp * inter,                            # sigmoid
        bytes_accessed=(Tp * hidden * x.dtype.itemsize         # x read
                        + Tp * hidden * x.dtype.itemsize       # out write
                        + n_tok_tiles * 3 * inter * hidden * w_bytes),  # weights
    )

    # TODO(synk): on v7x, single-buffering the x/out blocks (pipeline_mode=
    # pl.Buffered(1)) would recover ~2*tm*H*2B of VMEM for larger tiles.
    out = pl.pallas_call(
        functools.partial(_fused_mlp_kernel, ti=ti),
        out_shape=jax.ShapeDtypeStruct((Tp, hidden), x.dtype),
        grid_spec=pltpu.PrefetchScalarGridSpec(
            num_scalar_prefetch=0,
            grid=(n_tok_tiles, n_k),
            in_specs=[
                pl.BlockSpec((tm, hidden), lambda i, k: (i, 0)),      # x tile
                pl.BlockSpec((hidden, 2 * ti), lambda i, k: (0, k)),  # [gate|up]
                pl.BlockSpec((ti, hidden), lambda i, k: (k, 0)),      # down chunk
            ],
            out_specs=pl.BlockSpec((tm, hidden), lambda i, k: (i, 0)),
            scratch_shapes=[pltpu.VMEM((tm, hidden), jnp.float32)],
        ),
        compiler_params=pltpu.CompilerParams(
            dimension_semantics=("parallel", "arbitrary"),
            vmem_limit_bytes=vmem_limit_bytes,
        ),
        cost_estimate=cost,
    )(xp, w_gu_t, w_down_t)

    return out if Tp == T else out[:T]


# ---------------------------------------------------------------------------
# Reference + test
# ---------------------------------------------------------------------------
def _reference(x, w_gate_up, w_down):
    gate_up = x @ w_gate_up.T
    inter = gate_up.shape[-1] // 2
    gate, up = gate_up[:, :inter], gate_up[:, inter:]
    h = (gate * jax.nn.sigmoid(gate)) * up
    return h @ w_down.T


if __name__ == "__main__":
    # Small shapes consistent with the module: tokens=256, hidden=256, intermediate=512.
    T, H, I = 256, 256, 512

    key = jax.random.PRNGKey(0)
    kx, kg, kd = jax.random.split(key, 3)

    # bf16 activations / weights (f32 accumulation inside the kernel).
    x = jax.random.normal(kx, (T, H), dtype=jnp.float32).astype(jnp.bfloat16)
    # PyTorch Linear layouts: gate_up_proj.weight [2*I, H], down_proj.weight [H, I]
    w_gate_up = (jax.random.normal(kg, (2 * I, H), dtype=jnp.float32) * 0.02
                 ).astype(jnp.bfloat16)
    w_down = (jax.random.normal(kd, (H, I), dtype=jnp.float32) * 0.02
              ).astype(jnp.bfloat16)

    # Per-generation tiles / VMEM budget, then one-time weight prep
    # (split + transpose + gate/up interleave), outside the per-call hot path.
    tm, ti, vmem_limit, n_cores = select_mlp_config(I)
    w_gu_t, w_down_t = prepare_fused_mlp_weights(w_gate_up, w_down, ti)

    out = fused_mlp(x, w_gu_t, w_down_t, tm=tm, ti=ti,
                    vmem_limit_bytes=vmem_limit, n_cores=n_cores)
    out = jax.block_until_ready(out)

    # Reference in f32 on the same (bf16-quantized) values.
    ref = _reference(x.astype(jnp.float32),
                     w_gate_up.astype(jnp.float32),
                     w_down.astype(jnp.float32))

    assert out.shape == (T, H)
    assert jnp.allclose(out.astype(jnp.float32), ref, atol=5e-3, rtol=5e-2), \
        "mismatch vs reference"

    print("KERNEL_OK")
</pallas_src>

<mosaic_0001>
module attributes {stable_mosaic.version = 11 : i64} {
  func.func @_fused_mlp_kernel(%arg0: i32, %arg1: i32, %arg2: memref<256x256xbf16, #tpu.memory_space<vmem>>, %arg3: memref<256x512xbf16, #tpu.memory_space<vmem>>, %arg4: memref<256x256xbf16, #tpu.memory_space<vmem>>, %arg5: memref<256x256xbf16, #tpu.memory_space<vmem>>, %arg6: memref<256x256xf32, #tpu.memory_space<vmem>>) attributes {dimension_semantics = [#tpu.dimension_semantics<parallel>, #tpu.dimension_semantics<arbitrary>], iteration_bounds = array<i64: 1, 2>, scalar_prefetch = 0 : i64, scratch_operands = 1 : i64, tpu.core_type = #tpu.core_type<tc>, window_params = [{transform_indices = @transform_0, window_bounds = array<i64: 256, 256>}, {transform_indices = @transform_1, window_bounds = array<i64: 256, 512>}, {transform_indices = @transform_2, window_bounds = array<i64: 256, 256>}, {transform_indices = @transform_3, window_bounds = array<i64: 256, 256>}]} {
    %c0_i32 = arith.constant 0 : i32
    %0 = arith.cmpi eq, %arg1, %c0_i32 : i32
    %1 = arith.extui %0 : i1 to i32
    %c0_i32_0 = arith.constant 0 : i32
    %2 = arith.cmpi ne, %1, %c0_i32_0 : i32
    scf.if %2 {
      %cst_13 = arith.constant 0.000000e+00 : f32
      %24 = vector.broadcast %cst_13 : f32 to vector<256x256xf32>
      %c0_14 = arith.constant 0 : index
      %c0_15 = arith.constant 0 : index
      %25 = vector.load %arg6[%c0_14, %c0_15] : memref<256x256xf32, #tpu.memory_space<vmem>>, vector<256x256xf32>
      tpu.vector_store %arg6[%c0_14, %c0_15], %24 {strides = array<i32>} : memref<256x256xf32, #tpu.memory_space<vmem>>, vector<256x256xf32>,
    } else {
    }
    %c0 = arith.constant 0 : index
    %c0_1 = arith.constant 0 : index
    %3 = vector.load %arg2[%c0, %c0_1] : memref<256x256xbf16, #tpu.memory_space<vmem>>, vector<256x256xbf16>
    %c0_2 = arith.constant 0 : index
    %c0_3 = arith.constant 0 : index
    %4 = vector.load %arg3[%c0_2, %c0_3] : memref<256x512xbf16, #tpu.memory_space<vmem>>, vector<256x512xbf16>
    %cst = arith.constant dense<0.000000e+00> : vector<256x512xf32>
    %5 = tpu.matmul %3, %4, %cst {dimension_numbers = #tpu.dot_dimension_numbers<[1], [0], [0], [1], [0, 0, 1, 1], [], []>} : vector<256x256xbf16>, vector<256x512xbf16>, vector<256x512xf32> -> vector<256x512xf32>
    %6 = vector.extract_strided_slice %5 {offsets = [0, 0], sizes = [256, 256], strides = [1, 1]} : vector<256x512xf32> to vector<256x256xf32>
    %7 = vector.extract_strided_slice %5 {offsets = [0, 256], sizes = [256, 256], strides = [1, 1]} : vector<256x512xf32> to vector<256x256xf32>
    %8 = arith.negf %6 : vector<256x256xf32>
    %9 = math.exp %8 : vector<256x256xf32>
    %cst_4 = arith.constant 1.000000e+00 : f32
    %10 = vector.broadcast %cst_4 : f32 to vector<256x256xf32>
    %11 = arith.addf %10, %9 : vector<256x256xf32>
    %12 = arith.divf %10, %11 : vector<256x256xf32>
    %13 = arith.mulf %6, %12 : vector<256x256xf32>
    %14 = arith.mulf %13, %7 : vector<256x256xf32>
    %c0_5 = arith.constant 0 : index
    %c0_6 = arith.constant 0 : index
    %15 = vector.load %arg6[%c0_5, %c0_6] : memref<256x256xf32, #tpu.memory_space<vmem>>, vector<256x256xf32>
    %16 = arith.truncf %14 : vector<256x256xf32> to vector<256x256xbf16>
    %c0_7 = arith.constant 0 : index
    %c0_8 = arith.constant 0 : index
    %17 = vector.load %arg4[%c0_7, %c0_8] : memref<256x256xbf16, #tpu.memory_space<vmem>>, vector<256x256xbf16>
    %cst_9 = arith.constant dense<0.000000e+00> : vector<256x256xf32>
    %18 = tpu.matmul %16, %17, %cst_9 {dimension_numbers = #tpu.dot_dimension_numbers<[1], [0], [0], [1], [0, 0, 1, 1], [], []>} : vector<256x256xbf16>, vector<256x256xbf16>, vector<256x256xf32> -> vector<256x256xf32>
    %19 = arith.addf %15, %18 : vector<256x256xf32>
    %c0_10 = arith.constant 0 : index
    %c0_11 = arith.constant 0 : index
    %20 = vector.load %arg6[%c0_10, %c0_11] : memref<256x256xf32, #tpu.memory_space<vmem>>, vector<256x256xf32>
    tpu.vector_store %arg6[%c0_10, %c0_11], %19 {strides = array<i32>} : memref<256x256xf32, #tpu.memory_space<vmem>>, vector<256x256xf32>,
    %c1_i32 = arith.constant 1 : i32
    %21 = arith.cmpi eq, %arg1, %c1_i32 : i32
    %22 = arith.extui %21 : i1 to i32
    %c0_i32_12 = arith.constant 0 : i32
    %23 = arith.cmpi ne, %22, %c0_i32_12 : i32
    scf.if %23 {
      %c0_13 = arith.constant 0 : index
      %c0_14 = arith.constant 0 : index
      %24 = vector.load %arg6[%c0_13, %c0_14] : memref<256x256xf32, #tpu.memory_space<vmem>>, vector<256x256xf32>
      %25 = arith.truncf %24 : vector<256x256xf32> to vector<256x256xbf16>
      %c0_15 = arith.constant 0 : index
      %c0_16 = arith.constant 0 : index
      %26 = vector.load %arg5[%c0_15, %c0_16] : memref<256x256xbf16, #tpu.memory_space<vmem>>, vector<256x256xbf16>
      tpu.vector_store %arg5[%c0_15, %c0_16], %25 {strides = array<i32>} : memref<256x256xbf16, #tpu.memory_space<vmem>>, vector<256x256xbf16>,
    } else {
    }
    return
  }
  func.func @transform_0(%arg0: i32, %arg1: i32) -> (i32, i32) {
    %c0_i32 = arith.constant 0 : i32
    %c0_i32_0 = arith.constant 0 : i32
    return %arg0, %c0_i32 : i32, i32
  }
  func.func @transform_1(%arg0: i32, %arg1: i32) -> (i32, i32) {
    %c0_i32 = arith.constant 0 : i32
    %c0_i32_0 = arith.constant 0 : i32
    return %c0_i32, %arg1 : i32, i32
  }
  func.func @transform_2(%arg0: i32, %arg1: i32) -> (i32, i32) {
    %c0_i32 = arith.constant 0 : i32
    %c0_i32_0 = arith.constant 0 : i32
    return %arg1, %c0_i32 : i32, i32
  }
  func.func @transform_3(%arg0: i32, %arg1: i32) -> (i32, i32) {
    %c0_i32 = arith.constant 0 : i32
    %c0_i32_0 = arith.constant 0 : i32
    return %arg0, %c0_i32 : i32, i32
  }
}

</mosaic_0001>

<llo_original>
// kernel: fused_mlp.1
$region0: #{fused_mlp.1}
  #allocation0 [shape = 'u32[]', space=smem, size = 0x4, offset = 0x4, fixed_abs, tag = 'smem constant byte address 0x4 - core index']
  #allocation1 [shape = 'u32[144,128]{1,0:T(1,128)}', space=vmem, size = 0x12000, scoped, tag = 'internal scratch']
  #allocation2 [shape = 'f32[256,256]{1,0:T(8,128)}', space=vmem, size = 0x40000, scoped, tag = 'scratch operand']
  %s0 = inlined_call_operand.hbm [shape: bf16[256,256], index: 0, kind: input, shape index: {}]
  %s1 = inlined_call_operand.hbm [shape: bf16[256,1024], index: 1, kind: input, shape index: {}]
  %s2 = inlined_call_operand.hbm [shape: bf16[512,256], index: 2, kind: input, shape index: {}]
  %s3 = inlined_call_operand.hbm [shape: bf16[256,256], index: 3, kind: output, shape index: {}]
  %s4 = sld [smem:[#allocation0]]
  $region65: #{fused_mlp.1} parent=0
    _
  %s6 = ssub.s32 1, %s4
  %s7 = scalar_select 0, %s6, %s4
  $region1: #{fused_mlp.1} parent=0
    #allocation3 [shape = 'u8[131072]{0}', space=vmem, size = 0x20000, scoped, tag = 'input window, operand 0, single buffered']
    #allocation4 [shape = 's32[2]{0}', space=sflag, size = 0x8, scoped, tag = 'scoped memory for fused_mlp.1']
    #allocation5 [shape = 's32[2]{0}', space=sflag, size = 0x8, scoped, tag = 'scoped memory for fused_mlp.1']
    #allocation6 [shape = 'u8[524288]{0}', space=vmem, size = 0x80000, scoped, tag = 'input window, operand 1']
    #allocation7 [shape = 's32[2]{0}', space=sflag, size = 0x8, scoped, tag = 'scoped memory for fused_mlp.1']
    #allocation8 [shape = 'u8[262144]{0}', space=vmem, size = 0x40000, scoped, tag = 'input window, operand 2']
    #allocation9 [shape = 'u8[131072]{0}', space=vmem, size = 0x20000, scoped, tag = 'output window, operand 0, single buffered']
    %8 = vsyncpa [#allocation4], 0
    %9 = vsyncpa [#allocation7], 0
    %s10 = scalar_lea.sflag [#allocation7], 1
    %11 = vsyncpa %s10, 0
    %12 = vsyncpa [#allocation5], 0
    loop: start=0, step=1, limit=4
    $region2: #{fused_mlp.1} parent=1 // loop_pre_header
      _
    $region3: #{fused_mlp.1} parent=1 // loop_header
      %s14 = sphi 0, %s18
      %p15 = scmp.ge.s32.totalorder %s14, 4
      %s21 = sphi 0, %s33
      %s22 = sphi 0, %s29
      %s23 = sphi 0, %s21
      %s24 = sphi 0, %s22
      %s25 = sphi 0, %s23
      %s26 = sphi 0, %s24
      %s36 = sphi 0, %s38
      %s39 = sphi 0, %s36
      %s40 = sphi 0, %s39
      %s56 = sphi 0, %s40
      %s62 = sphi 0, %s64
      %s65 = sphi 0, %s62
      %s66 = sphi 0, %s65
      %s82 = sphi 0, %s66
      %s88 = sphi 0, %s90
      %s91 = sphi 0, %s88
      %s92 = sphi 0, %s91
      %s108 = sphi 0, %s92
      %s114 = sphi 0, %s116
      %s117 = sphi 0, %s114
      %s118 = sphi 0, %s117
      %s134 = sphi 0, %s118
    $region4: #{fused_mlp.1} parent=1 // loop_header_branch
      %17 = sbr.rel (%p15) target = $region8
    $region5: #{fused_mlp.1} parent=1 // loop_body
      %s19 = ssub.s32 %s14, 1
      %s20 = ssub.s32 %s14, 2
      %s27 = sadd.s32 1, %s22
      %p28 = scmp.ge.s32.totalorder %s27, 2
      %s29 = scalar_select %p28, 0, %s27
      %s30 = sadd.s32 1, %s21
      %s31 = scalar_select %p28, %s30, %s21
      %p32 = scmp.ge.s32.totalorder %s31, 1
      %s33 = scalar_select %p32, 0, %s31
      %s34 = ssub.s32 %s21, %s33
      %p35 = scmp.eq.s32.totalorder %s34, 0
      %s37 = sadd.s32 %s36, 1
      %s38 = scalar_select %p35, %s36, %s37
      %p41 = pneg %p35
      %p42 = scmp.eq.s32.totalorder %s14, 1
      %p43 = por %p41, %p42
      %p44 = scmp.ne.s32.totalorder %s36, %s39
      %p45 = scmp.eq.s32.totalorder %s14, 0
      %p46 = por %p44, %p45
      %p47 = scmp.ne.s32.totalorder %s36, %s39
      %p48 = scmp.eq.s32.totalorder %s19, 1
      %p49 = por %p47, %p48
      %p50 = scmp.ne.s32.totalorder %s39, %s40
      %p51 = scmp.eq.s32.totalorder %s19, 0
      %p52 = por %p50, %p51
      %p53 = scmp.ne.s32.totalorder %s39, %s40
      %p54 = scmp.eq.s32.totalorder %s20, 1
      %p55 = por %p53, %p54
      %p57 = scmp.ne.s32.totalorder %s40, %s56
      %p58 = scmp.eq.s32.totalorder %s20, 0
      %p59 = por %p57, %p58
      %s60 = ssub.s32 %s22, %s29
      %p61 = scmp.eq.s32.totalorder %s60, 0
      %s63 = sadd.s32 %s62, 1
      %s64 = scalar_select %p61, %s62, %s63
      %p67 = pneg %p61
      %p68 = scmp.eq.s32.totalorder %s14, 1
      %p69 = por %p67, %p68
      %p70 = scmp.ne.s32.totalorder %s62, %s65
      %p71 = scmp.eq.s32.totalorder %s14, 0
      %p72 = por %p70, %p71
      %p73 = scmp.ne.s32.totalorder %s62, %s65
      %p74 = scmp.eq.s32.totalorder %s19, 1
      %p75 = por %p73, %p74
      %p76 = scmp.ne.s32.totalorder %s65, %s66
      %p77 = scmp.eq.s32.totalorder %s19, 0
      %p78 = por %p76, %p77
      %p79 = scmp.ne.s32.totalorder %s65, %s66
      %p80 = scmp.eq.s32.totalorder %s20, 1
      %p81 = por %p79, %p80
      %p83 = scmp.ne.s32.totalorder %s66, %s82
      %p84 = scmp.eq.s32.totalorder %s20, 0
      %p85 = por %p83, %p84
      %s86 = ssub.s32 %s22, %s29
      %p87 = scmp.eq.s32.totalorder %s86, 0
      %s89 = sadd.s32 %s88, 1
      %s90 = scalar_select %p87, %s88, %s89
      %p93 = pneg %p87
      %p94 = scmp.eq.s32.totalorder %s14, 1
      %p95 = por %p93, %p94
      %p96 = scmp.ne.s32.totalorder %s88, %s91
      %p97 = scmp.eq.s32.totalorder %s14, 0
      %p98 = por %p96, %p97
      %p99 = scmp.ne.s32.totalorder %s88, %s91
      %p100 = scmp.eq.s32.totalorder %s19, 1
      %p101 = por %p99, %p100
      %p102 = scmp.ne.s32.totalorder %s91, %s92
      %p103 = scmp.eq.s32.totalorder %s19, 0
      %p104 = por %p102, %p103
      %p105 = scmp.ne.s32.totalorder %s91, %s92
      %p106 = scmp.eq.s32.totalorder %s20, 1
      %p107 = por %p105, %p106
      %p109 = scmp.ne.s32.totalorder %s92, %s108
      %p110 = scmp.eq.s32.totalorder %s20, 0
      %p111 = por %p109, %p110
      %s112 = ssub.s32 %s21, %s33
      %p113 = scmp.eq.s32.totalorder %s112, 0
      %s115 = sadd.s32 %s114, 1
      %s116 = scalar_select %p113, %s114, %s115
      %p119 = pneg %p113
      %p120 = scmp.eq.s32.totalorder %s14, 1
      %p121 = por %p119, %p120
      %p122 = scmp.ne.s32.totalorder %s114, %s117
      %p123 = scmp.eq.s32.totalorder %s14, 0
      %p124 = por %p122, %p123
      %p125 = scmp.ne.s32.totalorder %s114, %s117
      %p126 = scmp.eq.s32.totalorder %s19, 1
      %p127 = por %p125, %p126
      %p128 = scmp.ne.s32.totalorder %s117, %s118
      %p129 = scmp.eq.s32.totalorder %s19, 0
      %p130 = por %p128, %p129
      %p131 = scmp.ne.s32.totalorder %s117, %s118
      %p132 = scmp.eq.s32.totalorder %s20, 1
      %p133 = por %p131, %p132
      %p135 = scmp.ne.s32.totalorder %s118, %s134
      %p136 = scmp.eq.s32.totalorder %s20, 0
      %p137 = por %p135, %p136
      %p138 = scmp.le.s32.totalorder 1, %s14
      %p139 = scmp.lt.s32.totalorder %s14, 3
      %p140 = pnand %p138, %p139
      %p141 = pneg %p140
      // Predicated region
      $region9: #{fused_mlp.1} parent=5 // pred_check
        _
      $region10: #{fused_mlp.1} parent=5 // pred_check_branch
        %143 = sbr.rel (%p140) target = $region12
      $region11: #{fused_mlp.1} parent=5 // pred_region
        %s144 = ssub.s32 %s14, 1
        // Predicated region
        $region13: #{fused_mlp.1} parent=11 // pred_check
          %p145 = pneg %p52
        $region14: #{fused_mlp.1} parent=11 // pred_check_branch
          %147 = sbr.rel (%p145) target = $region16
        $region15: #{fused_mlp.1} parent=11 // pred_region
          %s148 = smul.u32 32, %s23
          %s150 = ssub.s32 4096, 4096
          %151 = vsyncadd [#allocation4], %s150
          %s152 = smul.addr %s148, 2
          %s153 = smul.addr %s152, 64
          %s154 = scalar_lea.hbm %s0, %s153
          %s155 = sshll.u32 [#allocation3], 4
          %s156 = int_to_ptr.vmem [resolvable:$true] %s155
          %161 = dma.hbm_to_vmem [thread:$0]  %s154, 4096, %s156, [#allocation4], 128, 128, 8
        $region16: #{fused_mlp.1} parent=11 // pred_fallthru
          _
      $region12: #{fused_mlp.1} parent=5 // pred_fallthru
        _
      %p162 = scmp.lt.s32.totalorder %s14, 2
      // Predicated region
      $region17: #{fused_mlp.1} parent=5 // pred_check
        %p163 = pneg %p162
      $region18: #{fused_mlp.1} parent=5 // pred_check_branch
        %165 = sbr.rel (%p163) target = $region20
      $region19: #{fused_mlp.1} parent=5 // pred_region
        // Predicated region
        $region21: #{fused_mlp.1} parent=19 // pred_check
          %p166 = pneg %p72
        $region22: #{fused_mlp.1} parent=19 // pred_check_branch
          %168 = sbr.rel (%p166) target = $region24
        $region23: #{fused_mlp.1} parent=19 // pred_region
          %s169 = sand.u32 %s14, 1
          %s170 = scalar_lea.sflag [#allocation7], %s169
          %s171 = sand.u32 %s62, 1
          %s172 = smul.addr %s171, 512
          %s173 = scalar_lea.vmem [#allocation6], %s172
          %s174 = smul.u32 4, %s22
          %s176 = ssub.s32 8192, 8192
          %177 = vsyncadd %s170, %s176
          %s178 = smul.addr %s174, 64
          %s179 = scalar_lea.hbm %s1, %s178
          %s180 = sshll.u32 %s173, 4
          %s181 = int_to_ptr.vmem [resolvable:$true] %s180
          %186 = dma.hbm_to_vmem [thread:$0]  %s179, 8192, %s181, %s170, 512, 256, 16
        $region24: #{fused_mlp.1} parent=19 // pred_fallthru
          _
        // Predicated region
        $region25: #{fused_mlp.1} parent=19 // pred_check
          %p187 = pneg %p98
        $region26: #{fused_mlp.1} parent=19 // pred_check_branch
          %189 = sbr.rel (%p187) target = $region28
        $region27: #{fused_mlp.1} parent=19 // pred_region
          %s190 = sand.u32 %s14, 1
          %s191 = scalar_lea.sflag [#allocation7], %s190
          %s192 = sand.u32 %s88, 1
          %s193 = smul.addr %s192, 256
          %s194 = scalar_lea.vmem [#allocation8], %s193
          %s195 = smul.u32 32, %s22
          %s197 = ssub.s32 4096, 4096
          %198 = vsyncadd %s191, %s197
          %s199 = smul.addr %s195, 2
          %s200 = smul.addr %s199, 64
          %s201 = scalar_lea.hbm %s2, %s200
          %s202 = sshll.u32 %s194, 4
          %s203 = int_to_ptr.vmem [resolvable:$true] %s202
          %208 = dma.hbm_to_vmem [thread:$0]  %s201, 4096, %s203, %s191, 128, 128, 8
        $region28: #{fused_mlp.1} parent=19 // pred_fallthru
          _
      $region20: #{fused_mlp.1} parent=5 // pred_fallthru
        _
      %p209 = scmp.le.s32.totalorder 1, %s14
      %p210 = scmp.lt.s32.totalorder %s14, 3
      %p211 = pnand %p209, %p210
      %p212 = pneg %p211
      // Predicated region
      $region29: #{fused_mlp.1} parent=5 // pred_check
        _
      $region30: #{fused_mlp.1} parent=5 // pred_check_branch
        %214 = sbr.rel (%p211) target = $region32
      $region31: #{fused_mlp.1} parent=5 // pred_region
        %s215 = ssub.s32 %s14, 1
        // Predicated region
        $region33: #{fused_mlp.1} parent=31 // pred_check
          %p216 = pneg %p52
        $region34: #{fused_mlp.1} parent=31 // pred_check_branch
          %218 = sbr.rel (%p216) target = $region36
        $region35: #{fused_mlp.1} parent=31 // pred_region
          %219 = dma.done [#allocation4], 4096
        $region36: #{fused_mlp.1} parent=31 // pred_fallthru
          _
        %s220 = sand.u32 %s19, 1
        %s221 = scalar_lea.sflag [#allocation7], %s220
        %s222 = sand.u32 %s65, 1
        %s223 = smul.addr %s222, 512
        %s224 = scalar_lea.vmem [#allocation6], %s223
        // Predicated region
        $region37: #{fused_mlp.1} parent=31 // pred_check
          %p225 = pneg %p78
        $region38: #{fused_mlp.1} parent=31 // pred_check_branch
          %227 = sbr.rel (%p225) target = $region40
        $region39: #{fused_mlp.1} parent=31 // pred_region
          %228 = dma.done %s221, 8192
        $region40: #{fused_mlp.1} parent=31 // pred_fallthru
          _
        %s229 = sand.u32 %s19, 1
        %s230 = scalar_lea.sflag [#allocation7], %s229
        %s231 = sand.u32 %s91, 1
        %s232 = smul.addr %s231, 256
        %s233 = scalar_lea.vmem [#allocation8], %s232
        // Predicated region
        $region41: #{fused_mlp.1} parent=31 // pred_check
          %p234 = pneg %p104
        $region42: #{fused_mlp.1} parent=31 // pred_check_branch
          %236 = sbr.rel (%p234) target = $region44
        $region43: #{fused_mlp.1} parent=31 // pred_region
          %237 = dma.done %s230, 4096
        $region44: #{fused_mlp.1} parent=31 // pred_fallthru
          _
        %p238 = pneg %p52
        %p239 = pneg %p49
        %s240 = sand.u32 %s19, 1
        %s241 = scalar_lea.sflag [#allocation7], %s240
        %s242 = sand.u32 %s65, 1
        %s243 = smul.addr %s242, 512
        %s244 = scalar_lea.vmem [#allocation6], %s243
        %p245 = pneg %p78
        %p246 = pneg %p75
        %s247 = sand.u32 %s19, 1
        %s248 = scalar_lea.sflag [#allocation7], %s247
        %s249 = sand.u32 %s91, 1
        %s250 = smul.addr %s249, 256
        %s251 = scalar_lea.vmem [#allocation8], %s250
        %p252 = pneg %p104
        %p253 = pneg %p101
        %p254 = pneg %p130
        %p255 = pneg %p127
        %s256 = smul.u32 32, %s23
        %s257 = smul.u32 4, %s24
        %s258 = smul.u32 32, %s24
        %s259 = smul.u32 32, %s23
        %p260 = scmp.eq.s32.totalorder %s24, 0
        // Predicated region
        $region45: #{fused_mlp.1} parent=31 // pred_check
          %p261 = pneg %p260
        $region46: #{fused_mlp.1} parent=31 // pred_check_branch
          %263 = sbr.rel (%p261) target = $region48
        $region47: #{fused_mlp.1} parent=31 // pred_region
          %264 = vst [vmem:[#allocation2] sm:$0xff] 0.0
          %265 = vst [vmem:[#allocation2 + $0x8] sm:$0xff] 0.0
          %266 = vst [vmem:[#allocation2 + $0x10] sm:$0xff] 0.0
          %267 = vst [vmem:[#allocation2 + $0x18] sm:$0xff] 0.0
          %268 = vst [vmem:[#allocation2 + $0x20] sm:$0xff] 0.0
          %269 = vst [vmem:[#allocation2 + $0x28] sm:$0xff] 0.0
          %270 = vst [vmem:[#allocation2 + $0x30] sm:$0xff] 0.0
          %271 = vst [vmem:[#allocation2 + $0x38] sm:$0xff] 0.0
          %272 = vst [vmem:[#allocation2 + $0x40] sm:$0xff] 0.0
          %273 = vst [vmem:[#allocation2 + $0x48] sm:$0xff] 0.0
          %274 = vst [vmem:[#allocation2 + $0x50] sm:$0xff] 0.0
          %275 = vst [vmem:[#allocation2 + $0x58] sm:$0xff] 0.0
          %276 = vst [vmem:[#allocation2 + $0x60] sm:$0xff] 0.0
          %277 = vst [vmem:[#allocation2 + $0x68] sm:$0xff] 0.0
          %278 = vst [vmem:[#allocation2 + $0x70] sm:$0xff] 0.0
          %279 = vst [vmem:[#allocation2 + $0x78] sm:$0xff] 0.0
          %280 = vst [vmem:[#allocation2 + $0x80] sm:$0xff] 0.0
          %281 = vst [vmem:[#allocation2 + $0x88] sm:$0xff] 0.0
          %282 = vst [vmem:[#allocation2 + $0x90] sm:$0xff] 0.0
          %283 = vst [vmem:[#allocation2 + $0x98] sm:$0xff] 0.0
          %284 = vst [vmem:[#allocation2 + $0xa0] sm:$0xff] 0.0
          %285 = vst [vmem:[#allocation2 + $0xa8] sm:$0xff] 0.0
          %286 = vst [vmem:[#allocation2 + $0xb0] sm:$0xff] 0.0
          %287 = vst [vmem:[#allocation2 + $0xb8] sm:$0xff] 0.0
          %288 = vst [vmem:[#allocation2 + $0xc0] sm:$0xff] 0.0
          %289 = vst [vmem:[#allocation2 + $0xc8] sm:$0xff] 0.0
          %290 = vst [vmem:[#allocation2 + $0xd0] sm:$0xff] 0.0
          %291 = vst [vmem:[#allocation2 + $0xd8] sm:$0xff] 0.0
          %292 = vst [vmem:[#allocation2 + $0xe0] sm:$0xff] 0.0
          %293 = vst [vmem:[#allocation2 + $0xe8] sm:$0xff] 0.0
          %294 = vst [vmem:[#allocation2 + $0xf0] sm:$0xff] 0.0
          %295 = vst [vmem:[#allocation2 + $0xf8] sm:$0xff] 0.0
          %296 = vst [vmem:[#allocation2 + $0x100] sm:$0xff] 0.0
          %297 = vst [vmem:[#allocation2 + $0x108] sm:$0xff] 0.0
          %298 = vst [vmem:[#allocation2 + $0x110] sm:$0xff] 0.0
          %299 = vst [vmem:[#allocation2 + $0x118] sm:$0xff] 0.0
          %300 = vst [vmem:[#allocation2 + $0x120] sm:$0xff] 0.0
          %301 = vst [vmem:[#allocation2 + $0x128] sm:$0xff] 0.0
          %302 = vst [vmem:[#allocation2 + $0x130] sm:$0xff] 0.0
          %303 = vst [vmem:[#allocation2 + $0x138] sm:$0xff] 0.0
          %304 = vst [vmem:[#allocation2 + $0x140] sm:$0xff] 0.0
          %305 = vst [vmem:[#allocation2 + $0x148] sm:$0xff] 0.0
          %306 = vst [vmem:[#allocation2 + $0x150] sm:$0xff] 0.0
          %307 = vst [vmem:[#allocation2 + $0x158] sm:$0xff] 0.0
          %308 = vst [vmem:[#allocation2 + $0x160] sm:$0xff] 0.0
          %309 = vst [vmem:[#allocation2 + $0x168] sm:$0xff] 0.0
          %310 = vst [vmem:[#allocation2 + $0x170] sm:$0xff] 0.0
          %311 = vst [vmem:[#allocation2 + $0x178] sm:$0xff] 0.0
          %312 = vst [vmem:[#allocation2 + $0x180] sm:$0xff] 0.0
          %313 = vst [vmem:[#allocation2 + $0x188] sm:$0xff] 0.0
          %314 = vst [vmem:[#allocation2 + $0x190] sm:$0xff] 0.0
          %315 = vst [vmem:[#allocation2 + $0x198] sm:$0xff] 0.0
          %316 = vst [vmem:[#allocation2 + $0x1a0] sm:$0xff] 0.0
          %317 = vst [vmem:[#allocation2 + $0x1a8] sm:$0xff] 0.0
          %318 = vst [vmem:[#allocation2 + $0x1b0] sm:$0xff] 0.0
          %319 = vst [vmem:[#allocation2 + $0x1b8] sm:$0xff] 0.0
          %320 = vst [vmem:[#allocation2 + $0x1c0] sm:$0xff] 0.0
          %321 = vst [vmem:[#allocation2 + $0x1c8] sm:$0xff] 0.0
          %322 = vst [vmem:[#allocation2 + $0x1d0] sm:$0xff] 0.0
          %323 = vst [vmem:[#allocation2 + $0x1d8] sm:$0xff] 0.0
          %324 = vst [vmem:[#allocation2 + $0x1e0] sm:$0xff] 0.0
          %325 = vst [vmem:[#allocation2 + $0x1e8] sm:$0xff] 0.0
          %326 = vst [vmem:[#allocation2 + $0x1f0] sm:$0xff] 0.0
          %327 = vst [vmem:[#allocation2 + $0x1f8] sm:$0xff] 0.0
        $region48: #{fused_mlp.1} parent=31 // pred_fallthru
          _
        %v328 = vld [vmem:[#allocation3] sm:$0xff]
        %v329 = vld [vmem:[#allocation3 + $0x8] sm:$0xff]
        %v330 = vld [vmem:[#allocation3 + $0x10] sm:$0xff]
        %v331 = vld [vmem:[#allocation3 + $0x18] sm:$0xff]
        %v332 = vld [vmem:[#allocation3 + $0x20] sm:$0xff]
        %v333 = vld [vmem:[#allocation3 + $0x28] sm:$0xff]
        %v334 = vld [vmem:[#allocation3 + $0x30] sm:$0xff]
        %v335 = vld [vmem:[#allocation3 + $0x38] sm:$0xff]
        %v336 = vld [vmem:[#allocation3 + $0x40] sm:$0xff]
        %v337 = vld [vmem:[#allocation3 + $0x48] sm:$0xff]
        %v338 = vld [vmem:[#allocation3 + $0x50] sm:$0xff]
        %v339 = vld [vmem:[#allocation3 + $0x58] sm:$0xff]
        %v340 = vld [vmem:[#allocation3 + $0x60] sm:$0xff]
        %v341 = vld [vmem:[#allocation3 + $0x68] sm:$0xff]
        %v342 = vld [vmem:[#allocation3 + $0x70] sm:$0xff]
        %v343 = vld [vmem:[#allocation3 + $0x78] sm:$0xff]
        %v344 = vld [vmem:[#allocation3 + $0x80] sm:$0xff]
        %v345 = vld [vmem:[#allocation3 + $0x88] sm:$0xff]
        %v346 = vld [vmem:[#allocation3 + $0x90] sm:$0xff]
        %v347 = vld [vmem:[#allocation3 + $0x98] sm:$0xff]
        %v348 = vld [vmem:[#allocation3 + $0xa0] sm:$0xff]
        %v349 = vld [vmem:[#allocation3 + $0xa8] sm:$0xff]
        %v350 = vld [vmem:[#allocation3 + $0xb0] sm:$0xff]
        %v351 = vld [vmem:[#allocation3 + $0xb8] sm:$0xff]
        %v352 = vld [vmem:[#allocation3 + $0xc0] sm:$0xff]
        %v353 = vld [vmem:[#allocation3 + $0xc8] sm:$0xff]
        %v354 = vld [vmem:[#allocation3 + $0xd0] sm:$0xff]
        %v355 = vld [vmem:[#allocation3 + $0xd8] sm:$0xff]
        %v356 = vld [vmem:[#allocation3 + $0xe0] sm:$0xff]
        %v357 = vld [vmem:[#allocation3 + $0xe8] sm:$0xff]
        %v358 = vld [vmem:[#allocation3 + $0xf0] sm:$0xff]
        %v359 = vld [vmem:[#allocation3 + $0xf8] sm:$0xff]
        %v360 = vld [vmem:[%s224] sm:$0xff]
        %v361 = vld [vmem:[%s224 + $0x8] sm:$0xff]
        %v362 = vld [vmem:[%s224 + $0x10] sm:$0xff]
        %v363 = vld [vmem:[%s224 + $0x18] sm:$0xff]
        %v364 = vld [vmem:[%s224 + $0x20] sm:$0xff]
        %v365 = vld [vmem:[%s224 + $0x28] sm:$0xff]
        %v366 = vld [vmem:[%s224 + $0x30] sm:$0xff]
        %v367 = vld [vmem:[%s224 + $0x38] sm:$0xff]
        %v368 = vld [vmem:[%s224 + $0x40] sm:$0xff]
        %v369 = vld [vmem:[%s224 + $0x48] sm:$0xff]
        %v370 = vld [vmem:[%s224 + $0x50] sm:$0xff]
        %v371 = vld [vmem:[%s224 + $0x58] sm:$0xff]
        %v372 = vld [vmem:[%s224 + $0x60] sm:$0xff]
        %v373 = vld [vmem:[%s224 + $0x68] sm:$0xff]
        %v374 = vld [vmem:[%s224 + $0x70] sm:$0xff]
        %v375 = vld [vmem:[%s224 + $0x78] sm:$0xff]
        %v376 = vld [vmem:[%s224 + $0x80] sm:$0xff]
        %v377 = vld [vmem:[%s224 + $0x88] sm:$0xff]
        %v378 = vld [vmem:[%s224 + $0x90] sm:$0xff]
        %v379 = vld [vmem:[%s224 + $0x98] sm:$0xff]
        %v380 = vld [vmem:[%s224 + $0xa0] sm:$0xff]
        %v381 = vld [vmem:[%s224 + $0xa8] sm:$0xff]
        %v382 = vld [vmem:[%s224 + $0xb0] sm:$0xff]
        %v383 = vld [vmem:[%s224 + $0xb8] sm:$0xff]
        %v384 = vld [vmem:[%s224 + $0xc0] sm:$0xff]
        %v385 = vld [vmem:[%s224 + $0xc8] sm:$0xff]
        %v386 = vld [vmem:[%s224 + $0xd0] sm:$0xff]
        %v387 = vld [vmem:[%s224 + $0xd8] sm:$0xff]
        %v388 = vld [vmem:[%s224 + $0xe0] sm:$0xff]
        %v389 = vld [vmem:[%s224 + $0xe8] sm:$0xff]
        %v390 = vld [vmem:[%s224 + $0xf0] sm:$0xff]
        %v391 = vld [vmem:[%s224 + $0xf8] sm:$0xff]
        %v392 = vld [vmem:[%s224 + $0x100] sm:$0xff]
        %v393 = vld [vmem:[%s224 + $0x108] sm:$0xff]
        %v394 = vld [vmem:[%s224 + $0x110] sm:$0xff]
        %v395 = vld [vmem:[%s224 + $0x118] sm:$0xff]
        %v396 = vld [vmem:[%s224 + $0x120] sm:$0xff]
        %v397 = vld [vmem:[%s224 + $0x128] sm:$0xff]
        %v398 = vld [vmem:[%s224 + $0x130] sm:$0xff]
        %v399 = vld [vmem:[%s224 + $0x138] sm:$0xff]
        %v400 = vld [vmem:[%s224 + $0x140] sm:$0xff]
        %v401 = vld [vmem:[%s224 + $0x148] sm:$0xff]
        %v402 = vld [vmem:[%s224 + $0x150] sm:$0xff]
        %v403 = vld [vmem:[%s224 + $0x158] sm:$0xff]
        %v404 = vld [vmem:[%s224 + $0x160] sm:$0xff]
        %v405 = vld [vmem:[%s224 + $0x168] sm:$0xff]
        %v406 = vld [vmem:[%s224 + $0x170] sm:$0xff]
        %v407 = vld [vmem:[%s224 + $0x178] sm:$0xff]
        %v408 = vld [vmem:[%s224 + $0x180] sm:$0xff]
        %v409 = vld [vmem:[%s224 + $0x188] sm:$0xff]
        %v410 = vld [vmem:[%s224 + $0x190] sm:$0xff]
        %v411 = vld [vmem:[%s224 + $0x198] sm:$0xff]
        %v412 = vld [vmem:[%s224 + $0x1a0] sm:$0xff]
        %v413 = vld [vmem:[%s224 + $0x1a8] sm:$0xff]
        %v414 = vld [vmem:[%s224 + $0x1b0] sm:$0xff]
        %v415 = vld [vmem:[%s224 + $0x1b8] sm:$0xff]
        %v416 = vld [vmem:[%s224 + $0x1c0] sm:$0xff]
        %v417 = vld [vmem:[%s224 + $0x1c8] sm:$0xff]
        %v418 = vld [vmem:[%s224 + $0x1d0] sm:$0xff]
        %v419 = vld [vmem:[%s224 + $0x1d8] sm:$0xff]
        %v420 = vld [vmem:[%s224 + $0x1e0] sm:$0xff]
        %v421 = vld [vmem:[%s224 + $0x1e8] sm:$0xff]
        %v422 = vld [vmem:[%s224 + $0x1f0] sm:$0xff]
        %v423 = vld [vmem:[%s224 + $0x1f8] sm:$0xff]
        %v456 = vunpack.c.l.b16 %v328
        %v457 = vunpack.c.h.b16 %v328
        %v458 = vunpack.c.l.b16 %v329
        %v459 = vunpack.c.h.b16 %v329
        %v460 = vunpack.c.l.b16 %v330
        %v461 = vunpack.c.h.b16 %v330
        %v462 = vunpack.c.l.b16 %v331
        %v463 = vunpack.c.h.b16 %v331
        %v464 = vunpack.c.l.b16 %v332
        %v465 = vunpack.c.h.b16 %v332
        %v466 = vunpack.c.l.b16 %v333
        %v467 = vunpack.c.h.b16 %v333
        %v468 = vunpack.c.l.b16 %v334
        %v469 = vunpack.c.h.b16 %v334
        %v470 = vunpack.c.l.b16 %v335
        %v471 = vunpack.c.h.b16 %v335
        %v472 = vunpack.c.l.b16 %v336
        %v473 = vunpack.c.h.b16 %v336
        %v474 = vunpack.c.l.b16 %v337
        %v475 = vunpack.c.h.b16 %v337
        %v476 = vunpack.c.l.b16 %v338
        %v477 = vunpack.c.h.b16 %v338
        %v478 = vunpack.c.l.b16 %v339
        %v479 = vunpack.c.h.b16 %v339
        %v480 = vunpack.c.l.b16 %v340
        %v481 = vunpack.c.h.b16 %v340
        %v482 = vunpack.c.l.b16 %v341
        %v483 = vunpack.c.h.b16 %v341
        %v484 = vunpack.c.l.b16 %v342
        %v485 = vunpack.c.h.b16 %v342
        %v486 = vunpack.c.l.b16 %v343
        %v487 = vunpack.c.h.b16 %v343
        %v488 = vunpack.c.l.b16 %v344
        %v489 = vunpack.c.h.b16 %v344
        %v490 = vunpack.c.l.b16 %v345
        %v491 = vunpack.c.h.b16 %v345
        %v492 = vunpack.c.l.b16 %v346
        %v493 = vunpack.c.h.b16 %v346
        %v494 = vunpack.c.l.b16 %v347
        %v495 = vunpack.c.h.b16 %v347
        %v496 = vunpack.c.l.b16 %v348
        %v497 = vunpack.c.h.b16 %v348
        %v498 = vunpack.c.l.b16 %v349
        %v499 = vunpack.c.h.b16 %v349
        %v500 = vunpack.c.l.b16 %v350
        %v501 = vunpack.c.h.b16 %v350
        %v502 = vunpack.c.l.b16 %v351
        %v503 = vunpack.c.h.b16 %v351
        %v504 = vunpack.c.l.b16 %v352
        %v505 = vunpack.c.h.b16 %v352
        %v506 = vunpack.c.l.b16 %v353
        %v507 = vunpack.c.h.b16 %v353
        %v508 = vunpack.c.l.b16 %v354
        %v509 = vunpack.c.h.b16 %v354
        %v510 = vunpack.c.l.b16 %v355
        %v511 = vunpack.c.h.b16 %v355
        %v512 = vunpack.c.l.b16 %v356
        %v513 = vunpack.c.h.b16 %v356
        %v514 = vunpack.c.l.b16 %v357
        %v515 = vunpack.c.h.b16 %v357
        %v516 = vunpack.c.l.b16 %v358
        %v517 = vunpack.c.h.b16 %v358
        %v518 = vunpack.c.l.b16 %v359
        %v519 = vunpack.c.h.b16 %v359
        %v520 = vpack.c.b16 %v458, %v456
        %v521 = vpack.c.b16 %v459, %v457
        %v522 = vpack.c.b16 %v462, %v460
        %v523 = vpack.c.b16 %v463, %v461
        %v524 = vpack.c.b16 %v466, %v464
        %v525 = vpack.c.b16 %v467, %v465
        %v526 = vpack.c.b16 %v470, %v468
        %v527 = vpack.c.b16 %v471, %v469
        %v528 = vpack.c.b16 %v474, %v472
        %v529 = vpack.c.b16 %v475, %v473
        %v530 = vpack.c.b16 %v478, %v476
        %v531 = vpack.c.b16 %v479, %v477
        %v532 = vpack.c.b16 %v482, %v480
        %v533 = vpack.c.b16 %v483, %v481
        %v534 = vpack.c.b16 %v486, %v484
        %v535 = vpack.c.b16 %v487, %v485
        %v536 = vpack.c.b16 %v490, %v488
        %v537 = vpack.c.b16 %v491, %v489
        %v538 = vpack.c.b16 %v494, %v492
        %v539 = vpack.c.b16 %v495, %v493
        %v540 = vpack.c.b16 %v498, %v496
        %v541 = vpack.c.b16 %v499, %v497
        %v542 = vpack.c.b16 %v502, %v500
        %v543 = vpack.c.b16 %v503, %v501
        %v544 = vpack.c.b16 %v506, %v504
        %v545 = vpack.c.b16 %v507, %v505
        %v546 = vpack.c.b16 %v510, %v508
        %v547 = vpack.c.b16 %v511, %v509
        %v548 = vpack.c.b16 %v514, %v512
        %v549 = vpack.c.b16 %v515, %v513
        %v550 = vpack.c.b16 %v518, %v516
        %v551 = vpack.c.b16 %v519, %v517
        %v648 = vunpack.c.l.b16 %v360
        %v649 = vunpack.c.h.b16 %v360
        %v650 = vunpack.c.l.b16 %v361
        %v651 = vunpack.c.h.b16 %v361
        %v652 = vunpack.c.l.b16 %v362
        %v653 = vunpack.c.h.b16 %v362
        %v654 = vunpack.c.l.b16 %v363
        %v655 = vunpack.c.h.b16 %v363
        %v656 = vunpack.c.l.b16 %v364
        %v657 = vunpack.c.h.b16 %v364
        %v658 = vunpack.c.l.b16 %v365
        %v659 = vunpack.c.h.b16 %v365
        %v660 = vunpack.c.l.b16 %v366
        %v661 = vunpack.c.h.b16 %v366
        %v662 = vunpack.c.l.b16 %v367
        %v663 = vunpack.c.h.b16 %v367
        %v664 = vunpack.c.l.b16 %v368
        %v665 = vunpack.c.h.b16 %v368
        %v666 = vunpack.c.l.b16 %v369
        %v667 = vunpack.c.h.b16 %v369
        %v668 = vunpack.c.l.b16 %v370
        %v669 = vunpack.c.h.b16 %v370
        %v670 = vunpack.c.l.b16 %v371
        %v671 = vunpack.c.h.b16 %v371
        %v672 = vunpack.c.l.b16 %v372
        %v673 = vunpack.c.h.b16 %v372
        %v674 = vunpack.c.l.b16 %v373
        %v675 = vunpack.c.h.b16 %v373
        %v676 = vunpack.c.l.b16 %v374
        %v677 = vunpack.c.h.b16 %v374
        %v678 = vunpack.c.l.b16 %v375
        %v679 = vunpack.c.h.b16 %v375
        %v680 = vunpack.c.l.b16 %v376
        %v681 = vunpack.c.h.b16 %v376
        %v682 = vunpack.c.l.b16 %v377
        %v683 = vunpack.c.h.b16 %v377
        %v684 = vunpack.c.l.b16 %v378
        %v685 = vunpack.c.h.b16 %v378
        %v686 = vunpack.c.l.b16 %v379
        %v687 = vunpack.c.h.b16 %v379
        %v688 = vunpack.c.l.b16 %v380
        %v689 = vunpack.c.h.b16 %v380
        %v690 = vunpack.c.l.b16 %v381
        %v691 = vunpack.c.h.b16 %v381
        %v692 = vunpack.c.l.b16 %v382
        %v693 = vunpack.c.h.b16 %v382
        %v694 = vunpack.c.l.b16 %v383
        %v695 = vunpack.c.h.b16 %v383
        %v696 = vunpack.c.l.b16 %v384
        %v697 = vunpack.c.h.b16 %v384
        %v698 = vunpack.c.l.b16 %v385
        %v699 = vunpack.c.h.b16 %v385
        %v700 = vunpack.c.l.b16 %v386
        %v701 = vunpack.c.h.b16 %v386
        %v702 = vunpack.c.l.b16 %v387
        %v703 = vunpack.c.h.b16 %v387
        %v704 = vunpack.c.l.b16 %v388
        %v705 = vunpack.c.h.b16 %v388
        %v706 = vunpack.c.l.b16 %v389
        %v707 = vunpack.c.h.b16 %v389
        %v708 = vunpack.c.l.b16 %v390
        %v709 = vunpack.c.h.b16 %v390
        %v710 = vunpack.c.l.b16 %v391
        %v711 = vunpack.c.h.b16 %v391
        %v712 = vunpack.c.l.b16 %v392
        %v713 = vunpack.c.h.b16 %v392
        %v714 = vunpack.c.l.b16 %v393
        %v715 = vunpack.c.h.b16 %v393
        %v716 = vunpack.c.l.b16 %v394
        %v717 = vunpack.c.h.b16 %v394
        %v718 = vunpack.c.l.b16 %v395
        %v719 = vunpack.c.h.b16 %v395
        %v720 = vunpack.c.l.b16 %v396
        %v721 = vunpack.c.h.b16 %v396
        %v722 = vunpack.c.l.b16 %v397
        %v723 = vunpack.c.h.b16 %v397
        %v724 = vunpack.c.l.b16 %v398
        %v725 = vunpack.c.h.b16 %v398
        %v726 = vunpack.c.l.b16 %v399
        %v727 = vunpack.c.h.b16 %v399
        %v728 = vunpack.c.l.b16 %v400
        %v729 = vunpack.c.h.b16 %v400
        %v730 = vunpack.c.l.b16 %v401
        %v731 = vunpack.c.h.b16 %v401
        %v732 = vunpack.c.l.b16 %v402
        %v733 = vunpack.c.h.b16 %v402
        %v734 = vunpack.c.l.b16 %v403
        %v735 = vunpack.c.h.b16 %v403
        %v736 = vunpack.c.l.b16 %v404
        %v737 = vunpack.c.h.b16 %v404
        %v738 = vunpack.c.l.b16 %v405
        %v739 = vunpack.c.h.b16 %v405
        %v740 = vunpack.c.l.b16 %v406
        %v741 = vunpack.c.h.b16 %v406
        %v742 = vunpack.c.l.b16 %v407
        %v743 = vunpack.c.h.b16 %v407
        %v744 = vunpack.c.l.b16 %v408
        %v745 = vunpack.c.h.b16 %v408
        %v746 = vunpack.c.l.b16 %v409
        %v747 = vunpack.c.h.b16 %v409
        %v748 = vunpack.c.l.b16 %v410
        %v749 = vunpack.c.h.b16 %v410
        %v750 = vunpack.c.l.b16 %v411
        %v751 = vunpack.c.h.b16 %v411
        %v752 = vunpack.c.l.b16 %v412
        %v753 = vunpack.c.h.b16 %v412
        %v754 = vunpack.c.l.b16 %v413
        %v755 = vunpack.c.h.b16 %v413
        %v756 = vunpack.c.l.b16 %v414
        %v757 = vunpack.c.h.b16 %v414
        %v758 = vunpack.c.l.b16 %v415
        %v759 = vunpack.c.h.b16 %v415
        %v760 = vunpack.c.l.b16 %v416
        %v761 = vunpack.c.h.b16 %v416
        %v762 = vunpack.c.l.b16 %v417
        %v763 = vunpack.c.h.b16 %v417
        %v764 = vunpack.c.l.b16 %v418
        %v765 = vunpack.c.h.b16 %v418
        %v766 = vunpack.c.l.b16 %v419
        %v767 = vunpack.c.h.b16 %v419
        %v768 = vunpack.c.l.b16 %v420
        %v769 = vunpack.c.h.b16 %v420
        %v770 = vunpack.c.l.b16 %v421
        %v771 = vunpack.c.h.b16 %v421
        %v772 = vunpack.c.l.b16 %v422
        %v773 = vunpack.c.h.b16 %v422
        %v774 = vunpack.c.l.b16 %v423
        %v775 = vunpack.c.h.b16 %v423
        %v776 = vpack.c.b16 %v652, %v648
        %v777 = vpack.c.b16 %v653, %v649
        %v778 = vpack.c.b16 %v654, %v650
        %v779 = vpack.c.b16 %v655, %v651
        %v780 = vpack.c.b16 %v660, %v656
        %v781 = vpack.c.b16 %v661, %v657
        %v782 = vpack.c.b16 %v662, %v658
        %v783 = vpack.c.b16 %v663, %v659
        %v784 = vpack.c.b16 %v668, %v664
        %v785 = vpack.c.b16 %v669, %v665
        %v786 = vpack.c.b16 %v670, %v666
        %v787 = vpack.c.b16 %v671, %v667
        %v788 = vpack.c.b16 %v676, %v672
        %v789 = vpack.c.b16 %v677, %v673
        %v790 = vpack.c.b16 %v678, %v674
        %v791 = vpack.c.b16 %v679, %v675
        %v792 = vpack.c.b16 %v684, %v680
        %v793 = vpack.c.b16 %v685, %v681
        %v794 = vpack.c.b16 %v686, %v682
        %v795 = vpack.c.b16 %v687, %v683
        %v796 = vpack.c.b16 %v692, %v688
        %v797 = vpack.c.b16 %v693, %v689
        %v798 = vpack.c.b16 %v694, %v690
        %v799 = vpack.c.b16 %v695, %v691
        %v800 = vpack.c.b16 %v700, %v696
        %v801 = vpack.c.b16 %v701, %v697
        %v802 = vpack.c.b16 %v702, %v698
        %v803 = vpack.c.b16 %v703, %v699
        %v804 = vpack.c.b16 %v708, %v704
        %v805 = vpack.c.b16 %v709, %v705
        %v806 = vpack.c.b16 %v710, %v706
        %v807 = vpack.c.b16 %v711, %v707
        %v808 = vpack.c.b16 %v716, %v712
        %v809 = vpack.c.b16 %v717, %v713
        %v810 = vpack.c.b16 %v718, %v714
        %v811 = vpack.c.b16 %v719, %v715
        %v812 = vpack.c.b16 %v724, %v720
        %v813 = vpack.c.b16 %v725, %v721
        %v814 = vpack.c.b16 %v726, %v722
        %v815 = vpack.c.b16 %v727, %v723
        %v816 = vpack.c.b16 %v732, %v728
        %v817 = vpack.c.b16 %v733, %v729
        %v818 = vpack.c.b16 %v734, %v730
        %v819 = vpack.c.b16 %v735, %v731
        %v820 = vpack.c.b16 %v740, %v736
        %v821 = vpack.c.b16 %v741, %v737
        %v822 = vpack.c.b16 %v742, %v738
        %v823 = vpack.c.b16 %v743, %v739
        %v824 = vpack.c.b16 %v748, %v744
        %v825 = vpack.c.b16 %v749, %v745
        %v826 = vpack.c.b16 %v750, %v746
        %v827 = vpack.c.b16 %v751, %v747
        %v828 = vpack.c.b16 %v756, %v752
        %v829 = vpack.c.b16 %v757, %v753
        %v830 = vpack.c.b16 %v758, %v754
        %v831 = vpack.c.b16 %v759, %v755
        %v832 = vpack.c.b16 %v764, %v760
        %v833 = vpack.c.b16 %v765, %v761
        %v834 = vpack.c.b16 %v766, %v762
        %v835 = vpack.c.b16 %v767, %v763
        %v836 = vpack.c.b16 %v772, %v768
        %v837 = vpack.c.b16 %v773, %v769
        %v838 = vpack.c.b16 %v774, %v770
        %v839 = vpack.c.b16 %v775, %v771
        %904 = vmatprep.subr.bf16.mxu0 %v777
        %905 = vmatpush1.bf16.msra.mxu0 %v776
        %906 = vmatprep.subr.bf16.mxu0 %v781
        %907 = vmatpush1.bf16.msra.mxu0 %v780
        %908 = vmatprep.subr.bf16.mxu0 %v785
        %909 = vmatpush1.bf16.msra.mxu0 %v784
        %910 = vmatprep.subr.bf16.mxu0 %v789
        %911 = vmatpush1.bf16.msra.mxu0 %v788
        %912 = vmatprep.subr.bf16.mxu0 %v793
        %913 = vmatpush1.bf16.msra.mxu0 %v792
        %914 = vmatprep.subr.bf16.mxu0 %v797
        %915 = vmatpush1.bf16.msra.mxu0 %v796
        %916 = vmatprep.subr.bf16.mxu0 %v801
        %917 = vmatpush1.bf16.msra.mxu0 %v800
        %918 = vmatprep.subr.bf16.mxu0 %v805
        %919 = vmatpush1.bf16.msra.mxu0 %v804
        %920 = vmatprep.subr.bf16.mxu0 %v809
        %921 = vmatpush1.bf16.msra.mxu0 %v808
        %922 = vmatprep.subr.bf16.mxu0 %v813
        %923 = vmatpush1.bf16.msra.mxu0 %v812
        %924 = vmatprep.subr.bf16.mxu0 %v817
        %925 = vmatpush1.bf16.msra.mxu0 %v816
        %926 = vmatprep.subr.bf16.mxu0 %v821
        %927 = vmatpush1.bf16.msra.mxu0 %v820
        %928 = vmatprep.subr.bf16.mxu0 %v825
        %929 = vmatpush1.bf16.msra.mxu0 %v824
        %930 = vmatprep.subr.bf16.mxu0 %v829
        %931 = vmatpush1.bf16.msra.mxu0 %v828
        %932 = vmatprep.subr.bf16.mxu0 %v833
        %933 = vmatpush1.bf16.msra.mxu0 %v832
        %934 = vmatprep.subr.bf16.mxu0 %v837
        %935 = vmatpush1.bf16.msra.mxu0 %v836
        %936 = vmatprep.mubr.bf16.mxu0 %v521
        %937 = vmatmul.mubr.bf16.gmra.mrb[0].mxu0 %v520
        %v938 = vpop.f32.mrb[0].mxu0
        %v939 = vadd.f32 0.0, %v938
        %v940 = vpop.f32.mrb[0].mxu0
        %v941 = vadd.f32 0.0, %v940
        %v942 = vpop.f32.mrb[0].mxu0
        %v943 = vadd.f32 0.0, %v942
        %v944 = vpop.f32.mrb[0].mxu0
        %v945 = vadd.f32 0.0, %v944
        %946 = vmatprep.mubr.bf16.mxu0 %v523
        %947 = vmatmul.mubr.bf16.gmra.mrb[0].mxu0 %v522
        %v948 = vpop.f32.mrb[0].mxu0
        %v949 = vadd.f32 0.0, %v948
        %v950 = vpop.f32.mrb[0].mxu0
        %v951 = vadd.f32 0.0, %v950
        %v952 = vpop.f32.mrb[0].mxu0
        %v953 = vadd.f32 0.0, %v952
        %v954 = vpop.f32.mrb[0].mxu0
        %v955 = vadd.f32 0.0, %v954
        %956 = vmatprep.mubr.bf16.mxu0 %v525
        %957 = vmatmul.mubr.bf16.gmra.mrb[0].mxu0 %v524
        %v958 = vpop.f32.mrb[0].mxu0
        %v959 = vadd.f32 0.0, %v958
        %v960 = vpop.f32.mrb[0].mxu0
        %v961 = vadd.f32 0.0, %v960
        %v962 = vpop.f32.mrb[0].mxu0
        %v963 = vadd.f32 0.0, %v962
        %v964 = vpop.f32.mrb[0].mxu0
        %v965 = vadd.f32 0.0, %v964
        %966 = vmatprep.mubr.bf16.mxu0 %v527
        %967 = vmatmul.mubr.bf16.gmra.mrb[0].mxu0 %v526
        %v968 = vpop.f32.mrb[0].mxu0
        %v969 = vadd.f32 0.0, %v968
        %v970 = vpop.f32.mrb[0].mxu0
        %v971 = vadd.f32 0.0, %v970
        %v972 = vpop.f32.mrb[0].mxu0
        %v973 = vadd.f32 0.0, %v972
        %v974 = vpop.f32.mrb[0].mxu0
        %v975 = vadd.f32 0.0, %v974
        %976 = vmatprep.mubr.bf16.mxu0 %v529
        %977 = vmatmul.mubr.bf16.gmra.mrb[0].mxu0 %v528
        %v978 = vpop.f32.mrb[0].mxu0
        %v979 = vadd.f32 0.0, %v978
        %v980 = vpop.f32.mrb[0].mxu0
        %v981 = vadd.f32 0.0, %v980
        %v982 = vpop.f32.mrb[0].mxu0
        %v983 = vadd.f32 0.0, %v982
        %v984 = vpop.f32.mrb[0].mxu0
        %v985 = vadd.f32 0.0, %v984
        %986 = vmatprep.mubr.bf16.mxu0 %v531
        %987 = vmatmul.mubr.bf16.gmra.mrb[0].mxu0 %v530
        %v988 = vpop.f32.mrb[0].mxu0
        %v989 = vadd.f32 0.0, %v988
        %v990 = vpop.f32.mrb[0].mxu0
        %v991 = vadd.f32 0.0, %v990
        %v992 = vpop.f32.mrb[0].mxu0
        %v993 = vadd.f32 0.0, %v992
        %v994 = vpop.f32.mrb[0].mxu0
        %v995 = vadd.f32 0.0, %v994
        %996 = vmatprep.mubr.bf16.mxu0 %v533
        %997 = vmatmul.mubr.bf16.gmra.mrb[0].mxu0 %v532
        %v998 = vpop.f32.mrb[0].mxu0
        %v999 = vadd.f32 0.0, %v998
        %v1000 = vpop.f32.mrb[0].mxu0
        %v1001 = vadd.f32 0.0, %v1000
        %v1002 = vpop.f32.mrb[0].mxu0
        %v1003 = vadd.f32 0.0, %v1002
        %v1004 = vpop.f32.mrb[0].mxu0
        %v1005 = vadd.f32 0.0, %v1004
        %1006 = vmatprep.mubr.bf16.mxu0 %v535
        %1007 = vmatmul.mubr.bf16.gmra.mrb[0].mxu0 %v534
        %v1008 = vpop.f32.mrb[0].mxu0
        %v1009 = vadd.f32 0.0, %v1008
        %v1010 = vpop.f32.mrb[0].mxu0
        %v1011 = vadd.f32 0.0, %v1010
        %v1012 = vpop.f32.mrb[0].mxu0
        %v1013 = vadd.f32 0.0, %v1012
        %v1014 = vpop.f32.mrb[0].mxu0
        %v1015 = vadd.f32 0.0, %v1014
        %1016 = vmatprep.mubr.bf16.mxu0 %v537
        %1017 = vmatmul.mubr.bf16.gmra.mrb[0].mxu0 %v536
        %v1018 = vpop.f32.mrb[0].mxu0
        %v1019 = vadd.f32 0.0, %v1018
        %v1020 = vpop.f32.mrb[0].mxu0
        %v1021 = vadd.f32 0.0, %v1020
        %v1022 = vpop.f32.mrb[0].mxu0
        %v1023 = vadd.f32 0.0, %v1022
        %v1024 = vpop.f32.mrb[0].mxu0
        %v1025 = vadd.f32 0.0, %v1024
        %1026 = vmatprep.mubr.bf16.mxu0 %v539
        %1027 = vmatmul.mubr.bf16.gmra.mrb[0].mxu0 %v538
        %v1028 = vpop.f32.mrb[0].mxu0
        %v1029 = vadd.f32 0.0, %v1028
        %v1030 = vpop.f32.mrb[0].mxu0
        %v1031 = vadd.f32 0.0, %v1030
        %v1032 = vpop.f32.mrb[0].mxu0
        %v1033 = vadd.f32 0.0, %v1032
        %v1034 = vpop.f32.mrb[0].mxu0
        %v1035 = vadd.f32 0.0, %v1034
        %1036 = vmatprep.mubr.bf16.mxu0 %v541
        %1037 = vmatmul.mubr.bf16.gmra.mrb[0].mxu0 %v540
        %v1038 = vpop.f32.mrb[0].mxu0
        %v1039 = vadd.f32 0.0, %v1038
        %v1040 = vpop.f32.mrb[0].mxu0
        %v1041 = vadd.f32 0.0, %v1040
        %v1042 = vpop.f32.mrb[0].mxu0
        %v1043 = vadd.f32 0.0, %v1042
        %v1044 = vpop.f32.mrb[0].mxu0
        %v1045 = vadd.f32 0.0, %v1044
        %1046 = vmatprep.mubr.bf16.mxu0 %v543
        %1047 = vmatmul.mubr.bf16.gmra.mrb[0].mxu0 %v542
        %v1048 = vpop.f32.mrb[0].mxu0
        %v1049 = vadd.f32 0.0, %v1048
        %v1050 = vpop.f32.mrb[0].mxu0
        %v1051 = vadd.f32 0.0, %v1050
        %v1052 = vpop.f32.mrb[0].mxu0
        %v1053 = vadd.f32 0.0, %v1052
        %v1054 = vpop.f32.mrb[0].mxu0
        %v1055 = vadd.f32 0.0, %v1054
        %1056 = vmatprep.mubr.bf16.mxu0 %v545
        %1057 = vmatmul.mubr.bf16.gmra.mrb[0].mxu0 %v544
        %v1058 = vpop.f32.mrb[0].mxu0
        %v1059 = vadd.f32 0.0, %v1058
        %v1060 = vpop.f32.mrb[0].mxu0
        %v1061 = vadd.f32 0.0, %v1060
        %v1062 = vpop.f32.mrb[0].mxu0
        %v1063 = vadd.f32 0.0, %v1062
        %v1064 = vpop.f32.mrb[0].mxu0
        %v1065 = vadd.f32 0.0, %v1064
        %1066 = vmatprep.mubr.bf16.mxu0 %v547
        %1067 = vmatmul.mubr.bf16.gmra.mrb[0].mxu0 %v546
        %v1068 = vpop.f32.mrb[0].mxu0
        %v1069 = vadd.f32 0.0, %v1068
        %v1070 = vpop.f32.mrb[0].mxu0
        %v1071 = vadd.f32 0.0, %v1070
        %v1072 = vpop.f32.mrb[0].mxu0
        %v1073 = vadd.f32 0.0, %v1072
        %v1074 = vpop.f32.mrb[0].mxu0
        %v1075 = vadd.f32 0.0, %v1074
        %1076 = vmatprep.mubr.bf16.mxu0 %v549
        %1077 = vmatmul.mubr.bf16.gmra.mrb[0].mxu0 %v548
        %v1078 = vpop.f32.mrb[0].mxu0
        %v1079 = vadd.f32 0.0, %v1078
        %v1080 = vpop.f32.mrb[0].mxu0
        %v1081 = vadd.f32 0.0, %v1080
        %v1082 = vpop.f32.mrb[0].mxu0
        %v1083 = vadd.f32 0.0, %v1082
        %v1084 = vpop.f32.mrb[0].mxu0
        %v1085 = vadd.f32 0.0, %v1084
        %1086 = vmatprep.mubr.bf16.mxu0 %v551
        %1087 = vmatmul.mubr.bf16.gmra.mrb[0].mxu0 %v550
        %v1088 = vpop.f32.mrb[0].mxu0
        %v1089 = vadd.f32 0.0, %v1088
        %v1090 = vpop.f32.mrb[0].mxu0
        %v1091 = vadd.f32 0.0, %v1090
        %v1092 = vpop.f32.mrb[0].mxu0
        %v1093 = vadd.f32 0.0, %v1092
        %v1094 = vpop.f32.mrb[0].mxu0
        %v1095 = vadd.f32 0.0, %v1094
        %1096 = vdwg.mxu0
        %1097 = vmatprep.subr.bf16.mxu0 %v779
        %1098 = vmatpush1.bf16.msra.mxu0 %v778
        %1099 = vmatprep.subr.bf16.mxu0 %v783
        %1100 = vmatpush1.bf16.msra.mxu0 %v782
        %1101 = vmatprep.subr.bf16.mxu0 %v787
        %1102 = vmatpush1.bf16.msra.mxu0 %v786
        %1103 = vmatprep.subr.bf16.mxu0 %v791
        %1104 = vmatpush1.bf16.msra.mxu0 %v790
        %1105 = vmatprep.subr.bf16.mxu0 %v795
        %1106 = vmatpush1.bf16.msra.mxu0 %v794
        %1107 = vmatprep.subr.bf16.mxu0 %v799
        %1108 = vmatpush1.bf16.msra.mxu0 %v798
        %1109 = vmatprep.subr.bf16.mxu0 %v803
        %1110 = vmatpush1.bf16.msra.mxu0 %v802
        %1111 = vmatprep.subr.bf16.mxu0 %v807
        %1112 = vmatpush1.bf16.msra.mxu0 %v806
        %1113 = vmatprep.subr.bf16.mxu0 %v811
        %1114 = vmatpush1.bf16.msra.mxu0 %v810
        %1115 = vmatprep.subr.bf16.mxu0 %v815
        %1116 = vmatpush1.bf16.msra.mxu0 %v814
        %1117 = vmatprep.subr.bf16.mxu0 %v819
        %1118 = vmatpush1.bf16.msra.mxu0 %v818
        %1119 = vmatprep.subr.bf16.mxu0 %v823
        %1120 = vmatpush1.bf16.msra.mxu0 %v822
        %1121 = vmatprep.subr.bf16.mxu0 %v827
        %1122 = vmatpush1.bf16.msra.mxu0 %v826
        %1123 = vmatprep.subr.bf16.mxu0 %v831
        %1124 = vmatpush1.bf16.msra.mxu0 %v830
        %1125 = vmatprep.subr.bf16.mxu0 %v835
        %1126 = vmatpush1.bf16.msra.mxu0 %v834
        %1127 = vmatprep.subr.bf16.mxu0 %v839
        %1128 = vmatpush1.bf16.msra.mxu0 %v838
        %1129 = vmatprep.mubr.bf16.mxu0 %v521
        %1130 = vmatmul.mubr.bf16.gmra.mrb[0].mxu0 %v520
        %v1131 = vpop.f32.mrb[0].mxu0
        %v1132 = vadd.f32 0.0, %v1131
        %v1133 = vpop.f32.mrb[0].mxu0
        %v1134 = vadd.f32 0.0, %v1133
        %v1135 = vpop.f32.mrb[0].mxu0
        %v1136 = vadd.f32 0.0, %v1135
        %v1137 = vpop.f32.mrb[0].mxu0
        %v1138 = vadd.f32 0.0, %v1137
        %1139 = vmatprep.mubr.bf16.mxu0 %v523
        %1140 = vmatmul.mubr.bf16.gmra.mrb[0].mxu0 %v522
        %v1141 = vpop.f32.mrb[0].mxu0
        %v1142 = vadd.f32 0.0, %v1141
        %v1143 = vpop.f32.mrb[0].mxu0
        %v1144 = vadd.f32 0.0, %v1143
        %v1145 = vpop.f32.mrb[0].mxu0
        %v1146 = vadd.f32 0.0, %v1145
        %v1147 = vpop.f32.mrb[0].mxu0
        %v1148 = vadd.f32 0.0, %v1147
        %1149 = vmatprep.mubr.bf16.mxu0 %v525
        %1150 = vmatmul.mubr.bf16.gmra.mrb[0].mxu0 %v524
        %v1151 = vpop.f32.mrb[0].mxu0
        %v1152 = vadd.f32 0.0, %v1151
        %v1153 = vpop.f32.mrb[0].mxu0
        %v1154 = vadd.f32 0.0, %v1153
        %v1155 = vpop.f32.mrb[0].mxu0
        %v1156 = vadd.f32 0.0, %v1155
        %v1157 = vpop.f32.mrb[0].mxu0
        %v1158 = vadd.f32 0.0, %v1157
        %1159 = vmatprep.mubr.bf16.mxu0 %v527
        %1160 = vmatmul.mubr.bf16.gmra.mrb[0].mxu0 %v526
        %v1161 = vpop.f32.mrb[0].mxu0
        %v1162 = vadd.f32 0.0, %v1161
        %v1163 = vpop.f32.mrb[0].mxu0
        %v1164 = vadd.f32 0.0, %v1163
        %v1165 = vpop.f32.mrb[0].mxu0
        %v1166 = vadd.f32 0.0, %v1165
        %v1167 = vpop.f32.mrb[0].mxu0
        %v1168 = vadd.f32 0.0, %v1167
        %1169 = vmatprep.mubr.bf16.mxu0 %v529
        %1170 = vmatmul.mubr.bf16.gmra.mrb[0].mxu0 %v528
        %v1171 = vpop.f32.mrb[0].mxu0
        %v1172 = vadd.f32 0.0, %v1171
        %v1173 = vpop.f32.mrb[0].mxu0
        %v1174 = vadd.f32 0.0, %v1173
        %v1175 = vpop.f32.mrb[0].mxu0
        %v1176 = vadd.f32 0.0, %v1175
        %v1177 = vpop.f32.mrb[0].mxu0
        %v1178 = vadd.f32 0.0, %v1177
        %1179 = vmatprep.mubr.bf16.mxu0 %v531
        %1180 = vmatmul.mubr.bf16.gmra.mrb[0].mxu0 %v530
        %v1181 = vpop.f32.mrb[0].mxu0
        %v1182 = vadd.f32 0.0, %v1181
        %v1183 = vpop.f32.mrb[0].mxu0
        %v1184 = vadd.f32 0.0, %v1183
        %v1185 = vpop.f32.mrb[0].mxu0
        %v1186 = vadd.f32 0.0, %v1185
        %v1187 = vpop.f32.mrb[0].mxu0
        %v1188 = vadd.f32 0.0, %v1187
        %1189 = vmatprep.mubr.bf16.mxu0 %v533
        %1190 = vmatmul.mubr.bf16.gmra.mrb[0].mxu0 %v532
        %v1191 = vpop.f32.mrb[0].mxu0
        %v1192 = vadd.f32 0.0, %v1191
        %v1193 = vpop.f32.mrb[0].mxu0
        %v1194 = vadd.f32 0.0, %v1193
        %v1195 = vpop.f32.mrb[0].mxu0
        %v1196 = vadd.f32 0.0, %v1195
        %v1197 = vpop.f32.mrb[0].mxu0
        %v1198 = vadd.f32 0.0, %v1197
        %1199 = vmatprep.mubr.bf16.mxu0 %v535
        %1200 = vmatmul.mubr.bf16.gmra.mrb[0].mxu0 %v534
        %v1201 = vpop.f32.mrb[0].mxu0
        %v1202 = vadd.f32 0.0, %v1201
        %v1203 = vpop.f32.mrb[0].mxu0
        %v1204 = vadd.f32 0.0, %v1203
        %v1205 = vpop.f32.mrb[0].mxu0
        %v1206 = vadd.f32 0.0, %v1205
        %v1207 = vpop.f32.mrb[0].mxu0
        %v1208 = vadd.f32 0.0, %v1207
        %1209 = vmatprep.mubr.bf16.mxu0 %v537
        %1210 = vmatmul.mubr.bf16.gmra.mrb[0].mxu0 %v536
        %v1211 = vpop.f32.mrb[0].mxu0
        %v1212 = vadd.f32 0.0, %v1211
        %v1213 = vpop.f32.mrb[0].mxu0
        %v1214 = vadd.f32 0.0, %v1213
        %v1215 = vpop.f32.mrb[0].mxu0
        %v1216 = vadd.f32 0.0, %v1215
        %v1217 = vpop.f32.mrb[0].mxu0
        %v1218 = vadd.f32 0.0, %v1217
        %1219 = vmatprep.mubr.bf16.mxu0 %v539
        %1220 = vmatmul.mubr.bf16.gmra.mrb[0].mxu0 %v538
        %v1221 = vpop.f32.mrb[0].mxu0
        %v1222 = vadd.f32 0.0, %v1221
        %v1223 = vpop.f32.mrb[0].mxu0
        %v1224 = vadd.f32 0.0, %v1223
        %v1225 = vpop.f32.mrb[0].mxu0
        %v1226 = vadd.f32 0.0, %v1225
        %v1227 = vpop.f32.mrb[0].mxu0
        %v1228 = vadd.f32 0.0, %v1227
        %1229 = vmatprep.mubr.bf16.mxu0 %v541
        %1230 = vmatmul.mubr.bf16.gmra.mrb[0].mxu0 %v540
        %v1231 = vpop.f32.mrb[0].mxu0
        %v1232 = vadd.f32 0.0, %v1231
        %v1233 = vpop.f32.mrb[0].mxu0
        %v1234 = vadd.f32 0.0, %v1233
        %v1235 = vpop.f32.mrb[0].mxu0
        %v1236 = vadd.f32 0.0, %v1235
        %v1237 = vpop.f32.mrb[0].mxu0
        %v1238 = vadd.f32 0.0, %v1237
        %1239 = vmatprep.mubr.bf16.mxu0 %v543
        %1240 = vmatmul.mubr.bf16.gmra.mrb[0].mxu0 %v542
        %v1241 = vpop.f32.mrb[0].mxu0
        %v1242 = vadd.f32 0.0, %v1241
        %v1243 = vpop.f32.mrb[0].mxu0
        %v1244 = vadd.f32 0.0, %v1243
        %v1245 = vpop.f32.mrb[0].mxu0
        %v1246 = vadd.f32 0.0, %v1245
        %v1247 = vpop.f32.mrb[0].mxu0
        %v1248 = vadd.f32 0.0, %v1247
        %1249 = vmatprep.mubr.bf16.mxu0 %v545
        %1250 = vmatmul.mubr.bf16.gmra.mrb[0].mxu0 %v544
        %v1251 = vpop.f32.mrb[0].mxu0
        %v1252 = vadd.f32 0.0, %v1251
        %v1253 = vpop.f32.mrb[0].mxu0
        %v1254 = vadd.f32 0.0, %v1253
        %v1255 = vpop.f32.mrb[0].mxu0
        %v1256 = vadd.f32 0.0, %v1255
        %v1257 = vpop.f32.mrb[0].mxu0
        %v1258 = vadd.f32 0.0, %v1257
        %1259 = vmatprep.mubr.bf16.mxu0 %v547
        %1260 = vmatmul.mubr.bf16.gmra.mrb[0].mxu0 %v546
        %v1261 = vpop.f32.mrb[0].mxu0
        %v1262 = vadd.f32 0.0, %v1261
        %v1263 = vpop.f32.mrb[0].mxu0
        %v1264 = vadd.f32 0.0, %v1263
        %v1265 = vpop.f32.mrb[0].mxu0
        %v1266 = vadd.f32 0.0, %v1265
        %v1267 = vpop.f32.mrb[0].mxu0
        %v1268 = vadd.f32 0.0, %v1267
        %1269 = vmatprep.mubr.bf16.mxu0 %v549
        %1270 = vmatmul.mubr.bf16.gmra.mrb[0].mxu0 %v548
        %v1271 = vpop.f32.mrb[0].mxu0
        %v1272 = vadd.f32 0.0, %v1271
        %v1273 = vpop.f32.mrb[0].mxu0
        %v1274 = vadd.f32 0.0, %v1273
        %v1275 = vpop.f32.mrb[0].mxu0
        %v1276 = vadd.f32 0.0, %v1275
        %v1277 = vpop.f32.mrb[0].mxu0
        %v1278 = vadd.f32 0.0, %v1277
        %1279 = vmatprep.mubr.bf16.mxu0 %v551
        %1280 = vmatmul.mubr.bf16.gmra.mrb[0].mxu0 %v550
        %v1281 = vpop.f32.mrb[0].mxu0
        %v1282 = vadd.f32 0.0, %v1281
        %v1283 = vpop.f32.mrb[0].mxu0
        %v1284 = vadd.f32 0.0, %v1283
        %v1285 = vpop.f32.mrb[0].mxu0
        %v1286 = vadd.f32 0.0, %v1285
        %v1287 = vpop.f32.mrb[0].mxu0
        %v1288 = vadd.f32 0.0, %v1287
        %1289 = vdwg.mxu0
        %v1290 = vxor.u32 %v939, 2147483648
        %v1291 = vxor.u32 %v941, 2147483648
        %v1292 = vxor.u32 %v943, 2147483648
        %v1293 = vxor.u32 %v945, 2147483648
        %v1294 = vxor.u32 %v949, 2147483648
        %v1295 = vxor.u32 %v951, 2147483648
        %v1296 = vxor.u32 %v953, 2147483648
        %v1297 = vxor.u32 %v955, 2147483648
        %v1298 = vxor.u32 %v959, 2147483648
        %v1299 = vxor.u32 %v961, 2147483648
        %v1300 = vxor.u32 %v963, 2147483648
        %v1301 = vxor.u32 %v965, 2147483648
        %v1302 = vxor.u32 %v969, 2147483648
        %v1303 = vxor.u32 %v971, 2147483648
        %v1304 = vxor.u32 %v973, 2147483648
        %v1305 = vxor.u32 %v975, 2147483648
        %v1306 = vxor.u32 %v979, 2147483648
        %v1307 = vxor.u32 %v981, 2147483648
        %v1308 = vxor.u32 %v983, 2147483648
        %v1309 = vxor.u32 %v985, 2147483648
        %v1310 = vxor.u32 %v989, 2147483648
        %v1311 = vxor.u32 %v991, 2147483648
        %v1312 = vxor.u32 %v993, 2147483648
        %v1313 = vxor.u32 %v995, 2147483648
        %v1314 = vxor.u32 %v999, 2147483648
        %v1315 = vxor.u32 %v1001, 2147483648
        %v1316 = vxor.u32 %v1003, 2147483648
        %v1317 = vxor.u32 %v1005, 2147483648
        %v1318 = vxor.u32 %v1009, 2147483648
        %v1319 = vxor.u32 %v1011, 2147483648
        %v1320 = vxor.u32 %v1013, 2147483648
        %v1321 = vxor.u32 %v1015, 2147483648
        %v1322 = vxor.u32 %v1019, 2147483648
        %v1323 = vxor.u32 %v1021, 2147483648
        %v1324 = vxor.u32 %v1023, 2147483648
        %v1325 = vxor.u32 %v1025, 2147483648
        %v1326 = vxor.u32 %v1029, 2147483648
        %v1327 = vxor.u32 %v1031, 2147483648
        %v1328 = vxor.u32 %v1033, 2147483648
        %v1329 = vxor.u32 %v1035, 2147483648
        %v1330 = vxor.u32 %v1039, 2147483648
        %v1331 = vxor.u32 %v1041, 2147483648
        %v1332 = vxor.u32 %v1043, 2147483648
        %v1333 = vxor.u32 %v1045, 2147483648
        %v1334 = vxor.u32 %v1049, 2147483648
        %v1335 = vxor.u32 %v1051, 2147483648
        %v1336 = vxor.u32 %v1053, 2147483648
        %v1337 = vxor.u32 %v1055, 2147483648
        %v1338 = vxor.u32 %v1059, 2147483648
        %v1339 = vxor.u32 %v1061, 2147483648
        %v1340 = vxor.u32 %v1063, 2147483648
        %v1341 = vxor.u32 %v1065, 2147483648
        %v1342 = vxor.u32 %v1069, 2147483648
        %v1343 = vxor.u32 %v1071, 2147483648
        %v1344 = vxor.u32 %v1073, 2147483648
        %v1345 = vxor.u32 %v1075, 2147483648
        %v1346 = vxor.u32 %v1079, 2147483648
        %v1347 = vxor.u32 %v1081, 2147483648
        %v1348 = vxor.u32 %v1083, 2147483648
        %v1349 = vxor.u32 %v1085, 2147483648
        %v1350 = vxor.u32 %v1089, 2147483648
        %v1351 = vxor.u32 %v1091, 2147483648
        %v1352 = vxor.u32 %v1093, 2147483648
        %v1353 = vxor.u32 %v1095, 2147483648
        %v1354 = vmul.f32 %v1290, 1.442695
        %v1355 = vpow.pop %v1354
        %v1356 = vmul.f32 %v1291, 1.442695
        %v1357 = vpow.pop %v1356
        %v1358 = vmul.f32 %v1292, 1.442695
        %v1359 = vpow.pop %v1358
        %v1360 = vmul.f32 %v1293, 1.442695
        %v1361 = vpow.pop %v1360
        %v1362 = vmul.f32 %v1294, 1.442695
        %v1363 = vpow.pop %v1362
        %v1364 = vmul.f32 %v1295, 1.442695
        %v1365 = vpow.pop %v1364
        %v1366 = vmul.f32 %v1296, 1.442695
        %v1367 = vpow.pop %v1366
        %v1368 = vmul.f32 %v1297, 1.442695
        %v1369 = vpow.pop %v1368
        %v1370 = vmul.f32 %v1298, 1.442695
        %v1371 = vpow.pop %v1370
        %v1372 = vmul.f32 %v1299, 1.442695
        %v1373 = vpow.pop %v1372
        %v1374 = vmul.f32 %v1300, 1.442695
        %v1375 = vpow.pop %v1374
        %v1376 = vmul.f32 %v1301, 1.442695
        %v1377 = vpow.pop %v1376
        %v1378 = vmul.f32 %v1302, 1.442695
        %v1379 = vpow.pop %v1378
        %v1380 = vmul.f32 %v1303, 1.442695
        %v1381 = vpow.pop %v1380
        %v1382 = vmul.f32 %v1304, 1.442695
        %v1383 = vpow.pop %v1382
        %v1384 = vmul.f32 %v1305, 1.442695
        %v1385 = vpow.pop %v1384
        %v1386 = vmul.f32 %v1306, 1.442695
        %v1387 = vpow.pop %v1386
        %v1388 = vmul.f32 %v1307, 1.442695
        %v1389 = vpow.pop %v1388
        %v1390 = vmul.f32 %v1308, 1.442695
        %v1391 = vpow.pop %v1390
        %v1392 = vmul.f32 %v1309, 1.442695
        %v1393 = vpow.pop %v1392
        %v1394 = vmul.f32 %v1310, 1.442695
        %v1395 = vpow.pop %v1394
        %v1396 = vmul.f32 %v1311, 1.442695
        %v1397 = vpow.pop %v1396
        %v1398 = vmul.f32 %v1312, 1.442695
        %v1399 = vpow.pop %v1398
        %v1400 = vmul.f32 %v1313, 1.442695
        %v1401 = vpow.pop %v1400
        %v1402 = vmul.f32 %v1314, 1.442695
        %v1403 = vpow.pop %v1402
        %v1404 = vmul.f32 %v1315, 1.442695
        %v1405 = vpow.pop %v1404
        %v1406 = vmul.f32 %v1316, 1.442695
        %v1407 = vpow.pop %v1406
        %v1408 = vmul.f32 %v1317, 1.442695
        %v1409 = vpow.pop %v1408
        %v1410 = vmul.f32 %v1318, 1.442695
        %v1411 = vpow.pop %v1410
        %v1412 = vmul.f32 %v1319, 1.442695
        %v1413 = vpow.pop %v1412
        %v1414 = vmul.f32 %v1320, 1.442695
        %v1415 = vpow.pop %v1414
        %v1416 = vmul.f32 %v1321, 1.442695
        %v1417 = vpow.pop %v1416
        %v1418 = vmul.f32 %v1322, 1.442695
        %v1419 = vpow.pop %v1418
        %v1420 = vmul.f32 %v1323, 1.442695
        %v1421 = vpow.pop %v1420
        %v1422 = vmul.f32 %v1324, 1.442695
        %v1423 = vpow.pop %v1422
        %v1424 = vmul.f32 %v1325, 1.442695
        %v1425 = vpow.pop %v1424
        %v1426 = vmul.f32 %v1326, 1.442695
        %v1427 = vpow.pop %v1426
        %v1428 = vmul.f32 %v1327, 1.442695
        %v1429 = vpow.pop %v1428
        %v1430 = vmul.f32 %v1328, 1.442695
        %v1431 = vpow.pop %v1430
        %v1432 = vmul.f32 %v1329, 1.442695
        %v1433 = vpow.pop %v1432
        %v1434 = vmul.f32 %v1330, 1.442695
        %v1435 = vpow.pop %v1434
        %v1436 = vmul.f32 %v1331, 1.442695
        %v1437 = vpow.pop %v1436
        %v1438 = vmul.f32 %v1332, 1.442695
        %v1439 = vpow.pop %v1438
        %v1440 = vmul.f32 %v1333, 1.442695
        %v1441 = vpow.pop %v1440
        %v1442 = vmul.f32 %v1334, 1.442695
        %v1443 = vpow.pop %v1442
        %v1444 = vmul.f32 %v1335, 1.442695
        %v1445 = vpow.pop %v1444
        %v1446 = vmul.f32 %v1336, 1.442695
        %v1447 = vpow.pop %v1446
        %v1448 = vmul.f32 %v1337, 1.442695
        %v1449 = vpow.pop %v1448
        %v1450 = vmul.f32 %v1338, 1.442695
        %v1451 = vpow.pop %v1450
        %v1452 = vmul.f32 %v1339, 1.442695
        %v1453 = vpow.pop %v1452
        %v1454 = vmul.f32 %v1340, 1.442695
        %v1455 = vpow.pop %v1454
        %v1456 = vmul.f32 %v1341, 1.442695
        %v1457 = vpow.pop %v1456
        %v1458 = vmul.f32 %v1342, 1.442695
        %v1459 = vpow.pop %v1458
        %v1460 = vmul.f32 %v1343, 1.442695
        %v1461 = vpow.pop %v1460
        %v1462 = vmul.f32 %v1344, 1.442695
        %v1463 = vpow.pop %v1462
        %v1464 = vmul.f32 %v1345, 1.442695
        %v1465 = vpow.pop %v1464
        %v1466 = vmul.f32 %v1346, 1.442695
        %v1467 = vpow.pop %v1466
        %v1468 = vmul.f32 %v1347, 1.442695
        %v1469 = vpow.pop %v1468
        %v1470 = vmul.f32 %v1348, 1.442695
        %v1471 = vpow.pop %v1470
        %v1472 = vmul.f32 %v1349, 1.442695
        %v1473 = vpow.pop %v1472
        %v1474 = vmul.f32 %v1350, 1.442695
        %v1475 = vpow.pop %v1474
        %v1476 = vmul.f32 %v1351, 1.442695
        %v1477 = vpow.pop %v1476
        %v1478 = vmul.f32 %v1352, 1.442695
        %v1479 = vpow.pop %v1478
        %v1480 = vmul.f32 %v1353, 1.442695
        %v1481 = vpow.pop %v1480
        %v1482 = vadd.f32 %v1355, 1.0
        %v1483 = vadd.f32 %v1357, 1.0
        %v1484 = vadd.f32 %v1359, 1.0
        %v1485 = vadd.f32 %v1361, 1.0
        %v1486 = vadd.f32 %v1363, 1.0
        %v1487 = vadd.f32 %v1365, 1.0
        %v1488 = vadd.f32 %v1367, 1.0
        %v1489 = vadd.f32 %v1369, 1.0
        %v1490 = vadd.f32 %v1371, 1.0
        %v1491 = vadd.f32 %v1373, 1.0
        %v1492 = vadd.f32 %v1375, 1.0
        %v1493 = vadd.f32 %v1377, 1.0
        %v1494 = vadd.f32 %v1379, 1.0
        %v1495 = vadd.f32 %v1381, 1.0
        %v1496 = vadd.f32 %v1383, 1.0
        %v1497 = vadd.f32 %v1385, 1.0
        %v1498 = vadd.f32 %v1387, 1.0
        %v1499 = vadd.f32 %v1389, 1.0
        %v1500 = vadd.f32 %v1391, 1.0
        %v1501 = vadd.f32 %v1393, 1.0
        %v1502 = vadd.f32 %v1395, 1.0
        %v1503 = vadd.f32 %v1397, 1.0
        %v1504 = vadd.f32 %v1399, 1.0
        %v1505 = vadd.f32 %v1401, 1.0
        %v1506 = vadd.f32 %v1403, 1.0
        %v1507 = vadd.f32 %v1405, 1.0
        %v1508 = vadd.f32 %v1407, 1.0
        %v1509 = vadd.f32 %v1409, 1.0
        %v1510 = vadd.f32 %v1411, 1.0
        %v1511 = vadd.f32 %v1413, 1.0
        %v1512 = vadd.f32 %v1415, 1.0
        %v1513 = vadd.f32 %v1417, 1.0
        %v1514 = vadd.f32 %v1419, 1.0
        %v1515 = vadd.f32 %v1421, 1.0
        %v1516 = vadd.f32 %v1423, 1.0
        %v1517 = vadd.f32 %v1425, 1.0
        %v1518 = vadd.f32 %v1427, 1.0
        %v1519 = vadd.f32 %v1429, 1.0
        %v1520 = vadd.f32 %v1431, 1.0
        %v1521 = vadd.f32 %v1433, 1.0
        %v1522 = vadd.f32 %v1435, 1.0
        %v1523 = vadd.f32 %v1437, 1.0
        %v1524 = vadd.f32 %v1439, 1.0
        %v1525 = vadd.f32 %v1441, 1.0
        %v1526 = vadd.f32 %v1443, 1.0
        %v1527 = vadd.f32 %v1445, 1.0
        %v1528 = vadd.f32 %v1447, 1.0
        %v1529 = vadd.f32 %v1449, 1.0
        %v1530 = vadd.f32 %v1451, 1.0
        %v1531 = vadd.f32 %v1453, 1.0
        %v1532 = vadd.f32 %v1455, 1.0
        %v1533 = vadd.f32 %v1457, 1.0
        %v1534 = vadd.f32 %v1459, 1.0
        %v1535 = vadd.f32 %v1461, 1.0
        %v1536 = vadd.f32 %v1463, 1.0
        %v1537 = vadd.f32 %v1465, 1.0
        %v1538 = vadd.f32 %v1467, 1.0
        %v1539 = vadd.f32 %v1469, 1.0
        %v1540 = vadd.f32 %v1471, 1.0
        %v1541 = vadd.f32 %v1473, 1.0
        %v1542 = vadd.f32 %v1475, 1.0
        %v1543 = vadd.f32 %v1477, 1.0
        %v1544 = vadd.f32 %v1479, 1.0
        %v1545 = vadd.f32 %v1481, 1.0
        %v1546 = vrcp.pop %v1482
        %v1547 = vmul.f32 1.0, %v1546
        %v1548 = vrcp.pop %v1483
        %v1549 = vmul.f32 1.0, %v1548
        %v1550 = vrcp.pop %v1484
        %v1551 = vmul.f32 1.0, %v1550
        %v1552 = vrcp.pop %v1485
        %v1553 = vmul.f32 1.0, %v1552
        %v1554 = vrcp.pop %v1486
        %v1555 = vmul.f32 1.0, %v1554
        %v1556 = vrcp.pop %v1487
        %v1557 = vmul.f32 1.0, %v1556
        %v1558 = vrcp.pop %v1488
        %v1559 = vmul.f32 1.0, %v1558
        %v1560 = vrcp.pop %v1489
        %v1561 = vmul.f32 1.0, %v1560
        %v1562 = vrcp.pop %v1490
        %v1563 = vmul.f32 1.0, %v1562
        %v1564 = vrcp.pop %v1491
        %v1565 = vmul.f32 1.0, %v1564
        %v1566 = vrcp.pop %v1492
        %v1567 = vmul.f32 1.0, %v1566
        %v1568 = vrcp.pop %v1493
        %v1569 = vmul.f32 1.0, %v1568
        %v1570 = vrcp.pop %v1494
        %v1571 = vmul.f32 1.0, %v1570
        %v1572 = vrcp.pop %v1495
        %v1573 = vmul.f32 1.0, %v1572
        %v1574 = vrcp.pop %v1496
        %v1575 = vmul.f32 1.0, %v1574
        %v1576 = vrcp.pop %v1497
        %v1577 = vmul.f32 1.0, %v1576
        %v1578 = vrcp.pop %v1498
        %v1579 = vmul.f32 1.0, %v1578
        %v1580 = vrcp.pop %v1499
        %v1581 = vmul.f32 1.0, %v1580
        %v1582 = vrcp.pop %v1500
        %v1583 = vmul.f32 1.0, %v1582
        %v1584 = vrcp.pop %v1501
        %v1585 = vmul.f32 1.0, %v1584
        %v1586 = vrcp.pop %v1502
        %v1587 = vmul.f32 1.0, %v1586
        %v1588 = vrcp.pop %v1503
        %v1589 = vmul.f32 1.0, %v1588
        %v1590 = vrcp.pop %v1504
        %v1591 = vmul.f32 1.0, %v1590
        %v1592 = vrcp.pop %v1505
        %v1593 = vmul.f32 1.0, %v1592
        %v1594 = vrcp.pop %v1506
        %v1595 = vmul.f32 1.0, %v1594
        %v1596 = vrcp.pop %v1507
        %v1597 = vmul.f32 1.0, %v1596
        %v1598 = vrcp.pop %v1508
        %v1599 = vmul.f32 1.0, %v1598
        %v1600 = vrcp.pop %v1509
        %v1601 = vmul.f32 1.0, %v1600
        %v1602 = vrcp.pop %v1510
        %v1603 = vmul.f32 1.0, %v1602
        %v1604 = vrcp.pop %v1511
        %v1605 = vmul.f32 1.0, %v1604
        %v1606 = vrcp.pop %v1512
        %v1607 = vmul.f32 1.0, %v1606
        %v1608 = vrcp.pop %v1513
        %v1609 = vmul.f32 1.0, %v1608
        %v1610 = vrcp.pop %v1514
        %v1611 = vmul.f32 1.0, %v1610
        %v1612 = vrcp.pop %v1515
        %v1613 = vmul.f32 1.0, %v1612
        %v1614 = vrcp.pop %v1516
        %v1615 = vmul.f32 1.0, %v1614
        %v1616 = vrcp.pop %v1517
        %v1617 = vmul.f32 1.0, %v1616
        %v1618 = vrcp.pop %v1518
        %v1619 = vmul.f32 1.0, %v1618
        %v1620 = vrcp.pop %v1519
        %v1621 = vmul.f32 1.0, %v1620
        %v1622 = vrcp.pop %v1520
        %v1623 = vmul.f32 1.0, %v1622
        %v1624 = vrcp.pop %v1521
        %v1625 = vmul.f32 1.0, %v1624
        %v1626 = vrcp.pop %v1522
        %v1627 = vmul.f32 1.0, %v1626
        %v1628 = vrcp.pop %v1523
        %v1629 = vmul.f32 1.0, %v1628
        %v1630 = vrcp.pop %v1524
        %v1631 = vmul.f32 1.0, %v1630
        %v1632 = vrcp.pop %v1525
        %v1633 = vmul.f32 1.0, %v1632
        %v1634 = vrcp.pop %v1526
        %v1635 = vmul.f32 1.0, %v1634
        %v1636 = vrcp.pop %v1527
        %v1637 = vmul.f32 1.0, %v1636
        %v1638 = vrcp.pop %v1528
        %v1639 = vmul.f32 1.0, %v1638
        %v1640 = vrcp.pop %v1529
        %v1641 = vmul.f32 1.0, %v1640
        %v1642 = vrcp.pop %v1530
        %v1643 = vmul.f32 1.0, %v1642
        %v1644 = vrcp.pop %v1531
        %v1645 = vmul.f32 1.0, %v1644
        %v1646 = vrcp.pop %v1532
        %v1647 = vmul.f32 1.0, %v1646
        %v1648 = vrcp.pop %v1533
        %v1649 = vmul.f32 1.0, %v1648
        %v1650 = vrcp.pop %v1534
        %v1651 = vmul.f32 1.0, %v1650
        %v1652 = vrcp.pop %v1535
        %v1653 = vmul.f32 1.0, %v1652
        %v1654 = vrcp.pop %v1536
        %v1655 = vmul.f32 1.0, %v1654
        %v1656 = vrcp.pop %v1537
        %v1657 = vmul.f32 1.0, %v1656
        %v1658 = vrcp.pop %v1538
        %v1659 = vmul.f32 1.0, %v1658
        %v1660 = vrcp.pop %v1539
        %v1661 = vmul.f32 1.0, %v1660
        %v1662 = vrcp.pop %v1540
        %v1663 = vmul.f32 1.0, %v1662
        %v1664 = vrcp.pop %v1541
        %v1665 = vmul.f32 1.0, %v1664
        %v1666 = vrcp.pop %v1542
        %v1667 = vmul.f32 1.0, %v1666
        %v1668 = vrcp.pop %v1543
        %v1669 = vmul.f32 1.0, %v1668
        %v1670 = vrcp.pop %v1544
        %v1671 = vmul.f32 1.0, %v1670
        %v1672 = vrcp.pop %v1545
        %v1673 = vmul.f32 1.0, %v1672
        %v1674 = vmul.f32 %v939, %v1547
        %v1675 = vmul.f32 %v941, %v1549
        %v1676 = vmul.f32 %v943, %v1551
        %v1677 = vmul.f32 %v945, %v1553
        %v1678 = vmul.f32 %v949, %v1555
        %v1679 = vmul.f32 %v951, %v1557
        %v1680 = vmul.f32 %v953, %v1559
        %v1681 = vmul.f32 %v955, %v1561
        %v1682 = vmul.f32 %v959, %v1563
        %v1683 = vmul.f32 %v961, %v1565
        %v1684 = vmul.f32 %v963, %v1567
        %v1685 = vmul.f32 %v965, %v1569
        %v1686 = vmul.f32 %v969, %v1571
        %v1687 = vmul.f32 %v971, %v1573
        %v1688 = vmul.f32 %v973, %v1575
        %v1689 = vmul.f32 %v975, %v1577
        %v1690 = vmul.f32 %v979, %v1579
        %v1691 = vmul.f32 %v981, %v1581
        %v1692 = vmul.f32 %v983, %v1583
        %v1693 = vmul.f32 %v985, %v1585
        %v1694 = vmul.f32 %v989, %v1587
        %v1695 = vmul.f32 %v991, %v1589
        %v1696 = vmul.f32 %v993, %v1591
        %v1697 = vmul.f32 %v995, %v1593
        %v1698 = vmul.f32 %v999, %v1595
        %v1699 = vmul.f32 %v1001, %v1597
        %v1700 = vmul.f32 %v1003, %v1599
        %v1701 = vmul.f32 %v1005, %v1601
        %v1702 = vmul.f32 %v1009, %v1603
        %v1703 = vmul.f32 %v1011, %v1605
        %v1704 = vmul.f32 %v1013, %v1607
        %v1705 = vmul.f32 %v1015, %v1609
        %v1706 = vmul.f32 %v1019, %v1611
        %v1707 = vmul.f32 %v1021, %v1613
        %v1708 = vmul.f32 %v1023, %v1615
        %v1709 = vmul.f32 %v1025, %v1617
        %v1710 = vmul.f32 %v1029, %v1619
        %v1711 = vmul.f32 %v1031, %v1621
        %v1712 = vmul.f32 %v1033, %v1623
        %v1713 = vmul.f32 %v1035, %v1625
        %v1714 = vmul.f32 %v1039, %v1627
        %v1715 = vmul.f32 %v1041, %v1629
        %v1716 = vmul.f32 %v1043, %v1631
        %v1717 = vmul.f32 %v1045, %v1633
        %v1718 = vmul.f32 %v1049, %v1635
        %v1719 = vmul.f32 %v1051, %v1637
        %v1720 = vmul.f32 %v1053, %v1639
        %v1721 = vmul.f32 %v1055, %v1641
        %v1722 = vmul.f32 %v1059, %v1643
        %v1723 = vmul.f32 %v1061, %v1645
        %v1724 = vmul.f32 %v1063, %v1647
        %v1725 = vmul.f32 %v1065, %v1649
        %v1726 = vmul.f32 %v1069, %v1651
        %v1727 = vmul.f32 %v1071, %v1653
        %v1728 = vmul.f32 %v1073, %v1655
        %v1729 = vmul.f32 %v1075, %v1657
        %v1730 = vmul.f32 %v1079, %v1659
        %v1731 = vmul.f32 %v1081, %v1661
        %v1732 = vmul.f32 %v1083, %v1663
        %v1733 = vmul.f32 %v1085, %v1665
        %v1734 = vmul.f32 %v1089, %v1667
        %v1735 = vmul.f32 %v1091, %v1669
        %v1736 = vmul.f32 %v1093, %v1671
        %v1737 = vmul.f32 %v1095, %v1673
        %v1738 = vmul.f32 %v1674, %v1132
        %v1739 = vmul.f32 %v1675, %v1134
        %v1740 = vmul.f32 %v1676, %v1136
        %v1741 = vmul.f32 %v1677, %v1138
        %v1742 = vmul.f32 %v1678, %v1142
        %v1743 = vmul.f32 %v1679, %v1144
        %v1744 = vmul.f32 %v1680, %v1146
        %v1745 = vmul.f32 %v1681, %v1148
        %v1746 = vmul.f32 %v1682, %v1152
        %v1747 = vmul.f32 %v1683, %v1154
        %v1748 = vmul.f32 %v1684, %v1156
        %v1749 = vmul.f32 %v1685, %v1158
        %v1750 = vmul.f32 %v1686, %v1162
        %v1751 = vmul.f32 %v1687, %v1164
        %v1752 = vmul.f32 %v1688, %v1166
        %v1753 = vmul.f32 %v1689, %v1168
        %v1754 = vmul.f32 %v1690, %v1172
        %v1755 = vmul.f32 %v1691, %v1174
        %v1756 = vmul.f32 %v1692, %v1176
        %v1757 = vmul.f32 %v1693, %v1178
        %v1758 = vmul.f32 %v1694, %v1182
        %v1759 = vmul.f32 %v1695, %v1184
        %v1760 = vmul.f32 %v1696, %v1186
        %v1761 = vmul.f32 %v1697, %v1188
        %v1762 = vmul.f32 %v1698, %v1192
        %v1763 = vmul.f32 %v1699, %v1194
        %v1764 = vmul.f32 %v1700, %v1196
        %v1765 = vmul.f32 %v1701, %v1198
        %v1766 = vmul.f32 %v1702, %v1202
        %v1767 = vmul.f32 %v1703, %v1204
        %v1768 = vmul.f32 %v1704, %v1206
        %v1769 = vmul.f32 %v1705, %v1208
        %v1770 = vmul.f32 %v1706, %v1212
        %v1771 = vmul.f32 %v1707, %v1214
        %v1772 = vmul.f32 %v1708, %v1216
        %v1773 = vmul.f32 %v1709, %v1218
        %v1774 = vmul.f32 %v1710, %v1222
        %v1775 = vmul.f32 %v1711, %v1224
        %v1776 = vmul.f32 %v1712, %v1226
        %v1777 = vmul.f32 %v1713, %v1228
        %v1778 = vmul.f32 %v1714, %v1232
        %v1779 = vmul.f32 %v1715, %v1234
        %v1780 = vmul.f32 %v1716, %v1236
        %v1781 = vmul.f32 %v1717, %v1238
        %v1782 = vmul.f32 %v1718, %v1242
        %v1783 = vmul.f32 %v1719, %v1244
        %v1784 = vmul.f32 %v1720, %v1246
        %v1785 = vmul.f32 %v1721, %v1248
        %v1786 = vmul.f32 %v1722, %v1252
        %v1787 = vmul.f32 %v1723, %v1254
        %v1788 = vmul.f32 %v1724, %v1256
        %v1789 = vmul.f32 %v1725, %v1258
        %v1790 = vmul.f32 %v1726, %v1262
        %v1791 = vmul.f32 %v1727, %v1264
        %v1792 = vmul.f32 %v1728, %v1266
        %v1793 = vmul.f32 %v1729, %v1268
        %v1794 = vmul.f32 %v1730, %v1272
        %v1795 = vmul.f32 %v1731, %v1274
        %v1796 = vmul.f32 %v1732, %v1276
        %v1797 = vmul.f32 %v1733, %v1278
        %v1798 = vmul.f32 %v1734, %v1282
        %v1799 = vmul.f32 %v1735, %v1284
        %v1800 = vmul.f32 %v1736, %v1286
        %v1801 = vmul.f32 %v1737, %v1288
        %v1802 = vld [vmem:[#allocation2] sm:$0xff]
        %v1803 = vld [vmem:[#allocation2 + $0x8] sm:$0xff]
        %v1804 = vld [vmem:[#allocation2 + $0x10] sm:$0xff]
        %v1805 = vld [vmem:[#allocation2 + $0x18] sm:$0xff]
        %v1806 = vld [vmem:[#allocation2 + $0x20] sm:$0xff]
        %v1807 = vld [vmem:[#allocation2 + $0x28] sm:$0xff]
        %v1808 = vld [vmem:[#allocation2 + $0x30] sm:$0xff]
        %v1809 = vld [vmem:[#allocation2 + $0x38] sm:$0xff]
        %v1810 = vld [vmem:[#allocation2 + $0x40] sm:$0xff]
        %v1811 = vld [vmem:[#allocation2 + $0x48] sm:$0xff]
        %v1812 = vld [vmem:[#allocation2 + $0x50] sm:$0xff]
        %v1813 = vld [vmem:[#allocation2 + $0x58] sm:$0xff]
        %v1814 = vld [vmem:[#allocation2 + $0x60] sm:$0xff]
        %v1815 = vld [vmem:[#allocation2 + $0x68] sm:$0xff]
        %v1816 = vld [vmem:[#allocation2 + $0x70] sm:$0xff]
        %v1817 = vld [vmem:[#allocation2 + $0x78] sm:$0xff]
        %v1818 = vld [vmem:[#allocation2 + $0x80] sm:$0xff]
        %v1819 = vld [vmem:[#allocation2 + $0x88] sm:$0xff]
        %v1820 = vld [vmem:[#allocation2 + $0x90] sm:$0xff]
        %v1821 = vld [vmem:[#allocation2 + $0x98] sm:$0xff]
        %v1822 = vld [vmem:[#allocation2 + $0xa0] sm:$0xff]
        %v1823 = vld [vmem:[#allocation2 + $0xa8] sm:$0xff]
        %v1824 = vld [vmem:[#allocation2 + $0xb0] sm:$0xff]
        %v1825 = vld [vmem:[#allocation2 + $0xb8] sm:$0xff]
        %v1826 = vld [vmem:[#allocation2 + $0xc0] sm:$0xff]
        %v1827 = vld [vmem:[#allocation2 + $0xc8] sm:$0xff]
        %v1828 = vld [vmem:[#allocation2 + $0xd0] sm:$0xff]
        %v1829 = vld [vmem:[#allocation2 + $0xd8] sm:$0xff]
        %v1830 = vld [vmem:[#allocation2 + $0xe0] sm:$0xff]
        %v1831 = vld [vmem:[#allocation2 + $0xe8] sm:$0xff]
        %v1832 = vld [vmem:[#allocation2 + $0xf0] sm:$0xff]
        %v1833 = vld [vmem:[#allocation2 + $0xf8] sm:$0xff]
        %v1834 = vld [vmem:[#allocation2 + $0x100] sm:$0xff]
        %v1835 = vld [vmem:[#allocation2 + $0x108] sm:$0xff]
        %v1836 = vld [vmem:[#allocation2 + $0x110] sm:$0xff]
        %v1837 = vld [vmem:[#allocation2 + $0x118] sm:$0xff]
        %v1838 = vld [vmem:[#allocation2 + $0x120] sm:$0xff]
        %v1839 = vld [vmem:[#allocation2 + $0x128] sm:$0xff]
        %v1840 = vld [vmem:[#allocation2 + $0x130] sm:$0xff]
        %v1841 = vld [vmem:[#allocation2 + $0x138] sm:$0xff]
        %v1842 = vld [vmem:[#allocation2 + $0x140] sm:$0xff]
        %v1843 = vld [vmem:[#allocation2 + $0x148] sm:$0xff]
        %v1844 = vld [vmem:[#allocation2 + $0x150] sm:$0xff]
        %v1845 = vld [vmem:[#allocation2 + $0x158] sm:$0xff]
        %v1846 = vld [vmem:[#allocation2 + $0x160] sm:$0xff]
        %v1847 = vld [vmem:[#allocation2 + $0x168] sm:$0xff]
        %v1848 = vld [vmem:[#allocation2 + $0x170] sm:$0xff]
        %v1849 = vld [vmem:[#allocation2 + $0x178] sm:$0xff]
        %v1850 = vld [vmem:[#allocation2 + $0x180] sm:$0xff]
        %v1851 = vld [vmem:[#allocation2 + $0x188] sm:$0xff]
        %v1852 = vld [vmem:[#allocation2 + $0x190] sm:$0xff]
        %v1853 = vld [vmem:[#allocation2 + $0x198] sm:$0xff]
        %v1854 = vld [vmem:[#allocation2 + $0x1a0] sm:$0xff]
        %v1855 = vld [vmem:[#allocation2 + $0x1a8] sm:$0xff]
        %v1856 = vld [vmem:[#allocation2 + $0x1b0] sm:$0xff]
        %v1857 = vld [vmem:[#allocation2 + $0x1b8] sm:$0xff]
        %v1858 = vld [vmem:[#allocation2 + $0x1c0] sm:$0xff]
        %v1859 = vld [vmem:[#allocation2 + $0x1c8] sm:$0xff]
        %v1860 = vld [vmem:[#allocation2 + $0x1d0] sm:$0xff]
        %v1861 = vld [vmem:[#allocation2 + $0x1d8] sm:$0xff]
        %v1862 = vld [vmem:[#allocation2 + $0x1e0] sm:$0xff]
        %v1863 = vld [vmem:[#allocation2 + $0x1e8] sm:$0xff]
        %v1864 = vld [vmem:[#allocation2 + $0x1f0] sm:$0xff]
        %v1865 = vld [vmem:[#allocation2 + $0x1f8] sm:$0xff]
        %v1866 = vpack.c.bf16 %v1740, %v1738
        %v1867 = vpack.c.bf16 %v1741, %v1739
        %v1868 = vpack.c.bf16 %v1744, %v1742
        %v1869 = vpack.c.bf16 %v1745, %v1743
        %v1870 = vpack.c.bf16 %v1748, %v1746
        %v1871 = vpack.c.bf16 %v1749, %v1747
        %v1872 = vpack.c.bf16 %v1752, %v1750
        %v1873 = vpack.c.bf16 %v1753, %v1751
        %v1874 = vpack.c.bf16 %v1756, %v1754
        %v1875 = vpack.c.bf16 %v1757, %v1755
        %v1876 = vpack.c.bf16 %v1760, %v1758
        %v1877 = vpack.c.bf16 %v1761, %v1759
        %v1878 = vpack.c.bf16 %v1764, %v1762
        %v1879 = vpack.c.bf16 %v1765, %v1763
        %v1880 = vpack.c.bf16 %v1768, %v1766
        %v1881 = vpack.c.bf16 %v1769, %v1767
        %v1882 = vpack.c.bf16 %v1772, %v1770
        %v1883 = vpack.c.bf16 %v1773, %v1771
        %v1884 = vpack.c.bf16 %v1776, %v1774
        %v1885 = vpack.c.bf16 %v1777, %v1775
        %v1886 = vpack.c.bf16 %v1780, %v1778
        %v1887 = vpack.c.bf16 %v1781, %v1779
        %v1888 = vpack.c.bf16 %v1784, %v1782
        %v1889 = vpack.c.bf16 %v1785, %v1783
        %v1890 = vpack.c.bf16 %v1788, %v1786
        %v1891 = vpack.c.bf16 %v1789, %v1787
        %v1892 = vpack.c.bf16 %v1792, %v1790
        %v1893 = vpack.c.bf16 %v1793, %v1791
        %v1894 = vpack.c.bf16 %v1796, %v1794
        %v1895 = vpack.c.bf16 %v1797, %v1795
        %v1896 = vpack.c.bf16 %v1800, %v1798
        %v1897 = vpack.c.bf16 %v1801, %v1799
        %v1898 = vld [vmem:[%s233] sm:$0xff]
        %v1899 = vld [vmem:[%s233 + $0x8] sm:$0xff]
        %v1900 = vld [vmem:[%s233 + $0x10] sm:$0xff]
        %v1901 = vld [vmem:[%s233 + $0x18] sm:$0xff]
        %v1902 = vld [vmem:[%s233 + $0x20] sm:$0xff]
        %v1903 = vld [vmem:[%s233 + $0x28] sm:$0xff]
        %v1904 = vld [vmem:[%s233 + $0x30] sm:$0xff]
        %v1905 = vld [vmem:[%s233 + $0x38] sm:$0xff]
        %v1906 = vld [vmem:[%s233 + $0x40] sm:$0xff]
        %v1907 = vld [vmem:[%s233 + $0x48] sm:$0xff]
        %v1908 = vld [vmem:[%s233 + $0x50] sm:$0xff]
        %v1909 = vld [vmem:[%s233 + $0x58] sm:$0xff]
        %v1910 = vld [vmem:[%s233 + $0x60] sm:$0xff]
        %v1911 = vld [vmem:[%s233 + $0x68] sm:$0xff]
        %v1912 = vld [vmem:[%s233 + $0x70] sm:$0xff]
        %v1913 = vld [vmem:[%s233 + $0x78] sm:$0xff]
        %v1914 = vld [vmem:[%s233 + $0x80] sm:$0xff]
        %v1915 = vld [vmem:[%s233 + $0x88] sm:$0xff]
        %v1916 = vld [vmem:[%s233 + $0x90] sm:$0xff]
        %v1917 = vld [vmem:[%s233 + $0x98] sm:$0xff]
        %v1918 = vld [vmem:[%s233 + $0xa0] sm:$0xff]
        %v1919 = vld [vmem:[%s233 + $0xa8] sm:$0xff]
        %v1920 = vld [vmem:[%s233 + $0xb0] sm:$0xff]
        %v1921 = vld [vmem:[%s233 + $0xb8] sm:$0xff]
        %v1922 = vld [vmem:[%s233 + $0xc0] sm:$0xff]
        %v1923 = vld [vmem:[%s233 + $0xc8] sm:$0xff]
        %v1924 = vld [vmem:[%s233 + $0xd0] sm:$0xff]
        %v1925 = vld [vmem:[%s233 + $0xd8] sm:$0xff]
        %v1926 = vld [vmem:[%s233 + $0xe0] sm:$0xff]
        %v1927 = vld [vmem:[%s233 + $0xe8] sm:$0xff]
        %v1928 = vld [vmem:[%s233 + $0xf0] sm:$0xff]
        %v1929 = vld [vmem:[%s233 + $0xf8] sm:$0xff]
        %v1962 = vunpack.c.l.b16 %v1898
        %v1963 = vunpack.c.h.b16 %v1898
        %v1964 = vunpack.c.l.b16 %v1899
        %v1965 = vunpack.c.h.b16 %v1899
        %v1966 = vunpack.c.l.b16 %v1900
        %v1967 = vunpack.c.h.b16 %v1900
        %v1968 = vunpack.c.l.b16 %v1901
        %v1969 = vunpack.c.h.b16 %v1901
        %v1970 = vunpack.c.l.b16 %v1902
        %v1971 = vunpack.c.h.b16 %v1902
        %v1972 = vunpack.c.l.b16 %v1903
        %v1973 = vunpack.c.h.b16 %v1903
        %v1974 = vunpack.c.l.b16 %v1904
        %v1975 = vunpack.c.h.b16 %v1904
        %v1976 = vunpack.c.l.b16 %v1905
        %v1977 = vunpack.c.h.b16 %v1905
        %v1978 = vunpack.c.l.b16 %v1906
        %v1979 = vunpack.c.h.b16 %v1906
        %v1980 = vunpack.c.l.b16 %v1907
        %v1981 = vunpack.c.h.b16 %v1907
        %v1982 = vunpack.c.l.b16 %v1908
        %v1983 = vunpack.c.h.b16 %v1908
        %v1984 = vunpack.c.l.b16 %v1909
        %v1985 = vunpack.c.h.b16 %v1909
        %v1986 = vunpack.c.l.b16 %v1910
        %v1987 = vunpack.c.h.b16 %v1910
        %v1988 = vunpack.c.l.b16 %v1911
        %v1989 = vunpack.c.h.b16 %v1911
        %v1990 = vunpack.c.l.b16 %v1912
        %v1991 = vunpack.c.h.b16 %v1912
        %v1992 = vunpack.c.l.b16 %v1913
        %v1993 = vunpack.c.h.b16 %v1913
        %v1994 = vunpack.c.l.b16 %v1914
        %v1995 = vunpack.c.h.b16 %v1914
        %v1996 = vunpack.c.l.b16 %v1915
        %v1997 = vunpack.c.h.b16 %v1915
        %v1998 = vunpack.c.l.b16 %v1916
        %v1999 = vunpack.c.h.b16 %v1916
        %v2000 = vunpack.c.l.b16 %v1917
        %v2001 = vunpack.c.h.b16 %v1917
        %v2002 = vunpack.c.l.b16 %v1918
        %v2003 = vunpack.c.h.b16 %v1918
        %v2004 = vunpack.c.l.b16 %v1919
        %v2005 = vunpack.c.h.b16 %v1919
        %v2006 = vunpack.c.l.b16 %v1920
        %v2007 = vunpack.c.h.b16 %v1920
        %v2008 = vunpack.c.l.b16 %v1921
        %v2009 = vunpack.c.h.b16 %v1921
        %v2010 = vunpack.c.l.b16 %v1922
        %v2011 = vunpack.c.h.b16 %v1922
        %v2012 = vunpack.c.l.b16 %v1923
        %v2013 = vunpack.c.h.b16 %v1923
        %v2014 = vunpack.c.l.b16 %v1924
        %v2015 = vunpack.c.h.b16 %v1924
        %v2016 = vunpack.c.l.b16 %v1925
        %v2017 = vunpack.c.h.b16 %v1925
        %v2018 = vunpack.c.l.b16 %v1926
        %v2019 = vunpack.c.h.b16 %v1926
        %v2020 = vunpack.c.l.b16 %v1927
        %v2021 = vunpack.c.h.b16 %v1927
        %v2022 = vunpack.c.l.b16 %v1928
        %v2023 = vunpack.c.h.b16 %v1928
        %v2024 = vunpack.c.l.b16 %v1929
        %v2025 = vunpack.c.h.b16 %v1929
        %v2026 = vpack.c.b16 %v1964, %v1962
        %v2027 = vpack.c.b16 %v1965, %v1963
        %v2028 = vpack.c.b16 %v1968, %v1966
        %v2029 = vpack.c.b16 %v1969, %v1967
        %v2030 = vpack.c.b16 %v1972, %v1970
        %v2031 = vpack.c.b16 %v1973, %v1971
        %v2032 = vpack.c.b16 %v1976, %v1974
        %v2033 = vpack.c.b16 %v1977, %v1975
        %v2034 = vpack.c.b16 %v1980, %v1978
        %v2035 = vpack.c.b16 %v1981, %v1979
        %v2036 = vpack.c.b16 %v1984, %v1982
        %v2037 = vpack.c.b16 %v1985, %v1983
        %v2038 = vpack.c.b16 %v1988, %v1986
        %v2039 = vpack.c.b16 %v1989, %v1987
        %v2040 = vpack.c.b16 %v1992, %v1990
        %v2041 = vpack.c.b16 %v1993, %v1991
        %v2042 = vpack.c.b16 %v1996, %v1994
        %v2043 = vpack.c.b16 %v1997, %v1995
        %v2044 = vpack.c.b16 %v2000, %v1998
        %v2045 = vpack.c.b16 %v2001, %v1999
        %v2046 = vpack.c.b16 %v2004, %v2002
        %v2047 = vpack.c.b16 %v2005, %v2003
        %v2048 = vpack.c.b16 %v2008, %v2006
        %v2049 = vpack.c.b16 %v2009, %v2007
        %v2050 = vpack.c.b16 %v2012, %v2010
        %v2051 = vpack.c.b16 %v2013, %v2011
        %v2052 = vpack.c.b16 %v2016, %v2014
        %v2053 = vpack.c.b16 %v2017, %v2015
        %v2054 = vpack.c.b16 %v2020, %v2018
        %v2055 = vpack.c.b16 %v2021, %v2019
        %v2056 = vpack.c.b16 %v2024, %v2022
        %v2057 = vpack.c.b16 %v2025, %v2023
        %2090 = vmatprep.subr.bf16.mxu0 %v2027
        %2091 = vmatpush1.bf16.msra.mxu0 %v2026
        %2092 = vmatprep.subr.bf16.mxu0 %v2029
        %2093 = vmatpush1.bf16.msra.mxu0 %v2028
        %2094 = vmatprep.subr.bf16.mxu0 %v2031
        %2095 = vmatpush1.bf16.msra.mxu0 %v2030
        %2096 = vmatprep.subr.bf16.mxu0 %v2033
        %2097 = vmatpush1.bf16.msra.mxu0 %v2032
        %2098 = vmatprep.subr.bf16.mxu0 %v2035
        %2099 = vmatpush1.bf16.msra.mxu0 %v2034
        %2100 = vmatprep.subr.bf16.mxu0 %v2037
        %2101 = vmatpush1.bf16.msra.mxu0 %v2036
        %2102 = vmatprep.subr.bf16.mxu0 %v2039
        %2103 = vmatpush1.bf16.msra.mxu0 %v2038
        %2104 = vmatprep.subr.bf16.mxu0 %v2041
        %2105 = vmatpush1.bf16.msra.mxu0 %v2040
        %2106 = vmatprep.subr.bf16.mxu0 %v2043
        %2107 = vmatpush1.bf16.msra.mxu0 %v2042
        %2108 = vmatprep.subr.bf16.mxu0 %v2045
        %2109 = vmatpush1.bf16.msra.mxu0 %v2044
        %2110 = vmatprep.subr.bf16.mxu0 %v2047
        %2111 = vmatpush1.bf16.msra.mxu0 %v2046
        %2112 = vmatprep.subr.bf16.mxu0 %v2049
        %2113 = vmatpush1.bf16.msra.mxu0 %v2048
        %2114 = vmatprep.subr.bf16.mxu0 %v2051
        %2115 = vmatpush1.bf16.msra.mxu0 %v2050
        %2116 = vmatprep.subr.bf16.mxu0 %v2053
        %2117 = vmatpush1.bf16.msra.mxu0 %v2052
        %2118 = vmatprep.subr.bf16.mxu0 %v2055
        %2119 = vmatpush1.bf16.msra.mxu0 %v2054
        %2120 = vmatprep.subr.bf16.mxu0 %v2057
        %2121 = vmatpush1.bf16.msra.mxu0 %v2056
        %2122 = vmatprep.mubr.bf16.mxu0 %v1867
        %2123 = vmatmul.mubr.bf16.gmra.mrb[0].mxu0 %v1866
        %v2124 = vpop.f32.mrb[0].mxu0
        %v2125 = vadd.f32 0.0, %v2124
        %v2126 = vpop.f32.mrb[0].mxu0
        %v2127 = vadd.f32 0.0, %v2126
        %v2128 = vpop.f32.mrb[0].mxu0
        %v2129 = vadd.f32 0.0, %v2128
        %v2130 = vpop.f32.mrb[0].mxu0
        %v2131 = vadd.f32 0.0, %v2130
        %2132 = vmatprep.mubr.bf16.mxu0 %v1869
        %2133 = vmatmul.mubr.bf16.gmra.mrb[0].mxu0 %v1868
        %v2134 = vpop.f32.mrb[0].mxu0
        %v2135 = vadd.f32 0.0, %v2134
        %v2136 = vpop.f32.mrb[0].mxu0
        %v2137 = vadd.f32 0.0, %v2136
        %v2138 = vpop.f32.mrb[0].mxu0
        %v2139 = vadd.f32 0.0, %v2138
        %v2140 = vpop.f32.mrb[0].mxu0
        %v2141 = vadd.f32 0.0, %v2140
        %2142 = vmatprep.mubr.bf16.mxu0 %v1871
        %2143 = vmatmul.mubr.bf16.gmra.mrb[0].mxu0 %v1870
        %v2144 = vpop.f32.mrb[0].mxu0
        %v2145 = vadd.f32 0.0, %v2144
        %v2146 = vpop.f32.mrb[0].mxu0
        %v2147 = vadd.f32 0.0, %v2146
        %v2148 = vpop.f32.mrb[0].mxu0
        %v2149 = vadd.f32 0.0, %v2148
        %v2150 = vpop.f32.mrb[0].mxu0
        %v2151 = vadd.f32 0.0, %v2150
        %2152 = vmatprep.mubr.bf16.mxu0 %v1873
        %2153 = vmatmul.mubr.bf16.gmra.mrb[0].mxu0 %v1872
        %v2154 = vpop.f32.mrb[0].mxu0
        %v2155 = vadd.f32 0.0, %v2154
        %v2156 = vpop.f32.mrb[0].mxu0
        %v2157 = vadd.f32 0.0, %v2156
        %v2158 = vpop.f32.mrb[0].mxu0
        %v2159 = vadd.f32 0.0, %v2158
        %v2160 = vpop.f32.mrb[0].mxu0
        %v2161 = vadd.f32 0.0, %v2160
        %2162 = vmatprep.mubr.bf16.mxu0 %v1875
        %2163 = vmatmul.mubr.bf16.gmra.mrb[0].mxu0 %v1874
        %v2164 = vpop.f32.mrb[0].mxu0
        %v2165 = vadd.f32 0.0, %v2164
        %v2166 = vpop.f32.mrb[0].mxu0
        %v2167 = vadd.f32 0.0, %v2166
        %v2168 = vpop.f32.mrb[0].mxu0
        %v2169 = vadd.f32 0.0, %v2168
        %v2170 = vpop.f32.mrb[0].mxu0
        %v2171 = vadd.f32 0.0, %v2170
        %2172 = vmatprep.mubr.bf16.mxu0 %v1877
        %2173 = vmatmul.mubr.bf16.gmra.mrb[0].mxu0 %v1876
        %v2174 = vpop.f32.mrb[0].mxu0
        %v2175 = vadd.f32 0.0, %v2174
        %v2176 = vpop.f32.mrb[0].mxu0
        %v2177 = vadd.f32 0.0, %v2176
        %v2178 = vpop.f32.mrb[0].mxu0
        %v2179 = vadd.f32 0.0, %v2178
        %v2180 = vpop.f32.mrb[0].mxu0
        %v2181 = vadd.f32 0.0, %v2180
        %2182 = vmatprep.mubr.bf16.mxu0 %v1879
        %2183 = vmatmul.mubr.bf16.gmra.mrb[0].mxu0 %v1878
        %v2184 = vpop.f32.mrb[0].mxu0
        %v2185 = vadd.f32 0.0, %v2184
        %v2186 = vpop.f32.mrb[0].mxu0
        %v2187 = vadd.f32 0.0, %v2186
        %v2188 = vpop.f32.mrb[0].mxu0
        %v2189 = vadd.f32 0.0, %v2188
        %v2190 = vpop.f32.mrb[0].mxu0
        %v2191 = vadd.f32 0.0, %v2190
        %2192 = vmatprep.mubr.bf16.mxu0 %v1881
        %2193 = vmatmul.mubr.bf16.gmra.mrb[0].mxu0 %v1880
        %v2194 = vpop.f32.mrb[0].mxu0
        %v2195 = vadd.f32 0.0, %v2194
        %v2196 = vpop.f32.mrb[0].mxu0
        %v2197 = vadd.f32 0.0, %v2196
        %v2198 = vpop.f32.mrb[0].mxu0
        %v2199 = vadd.f32 0.0, %v2198
        %v2200 = vpop.f32.mrb[0].mxu0
        %v2201 = vadd.f32 0.0, %v2200
        %2202 = vmatprep.mubr.bf16.mxu0 %v1883
        %2203 = vmatmul.mubr.bf16.gmra.mrb[0].mxu0 %v1882
        %v2204 = vpop.f32.mrb[0].mxu0
        %v2205 = vadd.f32 0.0, %v2204
        %v2206 = vpop.f32.mrb[0].mxu0
        %v2207 = vadd.f32 0.0, %v2206
        %v2208 = vpop.f32.mrb[0].mxu0
        %v2209 = vadd.f32 0.0, %v2208
        %v2210 = vpop.f32.mrb[0].mxu0
        %v2211 = vadd.f32 0.0, %v2210
        %2212 = vmatprep.mubr.bf16.mxu0 %v1885
        %2213 = vmatmul.mubr.bf16.gmra.mrb[0].mxu0 %v1884
        %v2214 = vpop.f32.mrb[0].mxu0
        %v2215 = vadd.f32 0.0, %v2214
        %v2216 = vpop.f32.mrb[0].mxu0
        %v2217 = vadd.f32 0.0, %v2216
        %v2218 = vpop.f32.mrb[0].mxu0
        %v2219 = vadd.f32 0.0, %v2218
        %v2220 = vpop.f32.mrb[0].mxu0
        %v2221 = vadd.f32 0.0, %v2220
        %2222 = vmatprep.mubr.bf16.mxu0 %v1887
        %2223 = vmatmul.mubr.bf16.gmra.mrb[0].mxu0 %v1886
        %v2224 = vpop.f32.mrb[0].mxu0
        %v2225 = vadd.f32 0.0, %v2224
        %v2226 = vpop.f32.mrb[0].mxu0
        %v2227 = vadd.f32 0.0, %v2226
        %v2228 = vpop.f32.mrb[0].mxu0
        %v2229 = vadd.f32 0.0, %v2228
        %v2230 = vpop.f32.mrb[0].mxu0
        %v2231 = vadd.f32 0.0, %v2230
        %2232 = vmatprep.mubr.bf16.mxu0 %v1889
        %2233 = vmatmul.mubr.bf16.gmra.mrb[0].mxu0 %v1888
        %v2234 = vpop.f32.mrb[0].mxu0
        %v2235 = vadd.f32 0.0, %v2234
        %v2236 = vpop.f32.mrb[0].mxu0
        %v2237 = vadd.f32 0.0, %v2236
        %v2238 = vpop.f32.mrb[0].mxu0
        %v2239 = vadd.f32 0.0, %v2238
        %v2240 = vpop.f32.mrb[0].mxu0
        %v2241 = vadd.f32 0.0, %v2240
        %2242 = vmatprep.mubr.bf16.mxu0 %v1891
        %2243 = vmatmul.mubr.bf16.gmra.mrb[0].mxu0 %v1890
        %v2244 = vpop.f32.mrb[0].mxu0
        %v2245 = vadd.f32 0.0, %v2244
        %v2246 = vpop.f32.mrb[0].mxu0
        %v2247 = vadd.f32 0.0, %v2246
        %v2248 = vpop.f32.mrb[0].mxu0
        %v2249 = vadd.f32 0.0, %v2248
        %v2250 = vpop.f32.mrb[0].mxu0
        %v2251 = vadd.f32 0.0, %v2250
        %2252 = vmatprep.mubr.bf16.mxu0 %v1893
        %2253 = vmatmul.mubr.bf16.gmra.mrb[0].mxu0 %v1892
        %v2254 = vpop.f32.mrb[0].mxu0
        %v2255 = vadd.f32 0.0, %v2254
        %v2256 = vpop.f32.mrb[0].mxu0
        %v2257 = vadd.f32 0.0, %v2256
        %v2258 = vpop.f32.mrb[0].mxu0
        %v2259 = vadd.f32 0.0, %v2258
        %v2260 = vpop.f32.mrb[0].mxu0
        %v2261 = vadd.f32 0.0, %v2260
        %2262 = vmatprep.mubr.bf16.mxu0 %v1895
        %2263 = vmatmul.mubr.bf16.gmra.mrb[0].mxu0 %v1894
        %v2264 = vpop.f32.mrb[0].mxu0
        %v2265 = vadd.f32 0.0, %v2264
        %v2266 = vpop.f32.mrb[0].mxu0
        %v2267 = vadd.f32 0.0, %v2266
        %v2268 = vpop.f32.mrb[0].mxu0
        %v2269 = vadd.f32 0.0, %v2268
        %v2270 = vpop.f32.mrb[0].mxu0
        %v2271 = vadd.f32 0.0, %v2270
        %2272 = vmatprep.mubr.bf16.mxu0 %v1897
        %2273 = vmatmul.mubr.bf16.gmra.mrb[0].mxu0 %v1896
        %v2274 = vpop.f32.mrb[0].mxu0
        %v2275 = vadd.f32 0.0, %v2274
        %v2276 = vpop.f32.mrb[0].mxu0
        %v2277 = vadd.f32 0.0, %v2276
        %v2278 = vpop.f32.mrb[0].mxu0
        %v2279 = vadd.f32 0.0, %v2278
        %v2280 = vpop.f32.mrb[0].mxu0
        %v2281 = vadd.f32 0.0, %v2280
        %2282 = vdwg.mxu0
        %v2283 = vadd.f32 %v1802, %v2125
        %v2284 = vadd.f32 %v1803, %v2127
        %v2285 = vadd.f32 %v1804, %v2129
        %v2286 = vadd.f32 %v1805, %v2131
        %v2287 = vadd.f32 %v1806, %v2135
        %v2288 = vadd.f32 %v1807, %v2137
        %v2289 = vadd.f32 %v1808, %v2139
        %v2290 = vadd.f32 %v1809, %v2141
        %v2291 = vadd.f32 %v1810, %v2145
        %v2292 = vadd.f32 %v1811, %v2147
        %v2293 = vadd.f32 %v1812, %v2149
        %v2294 = vadd.f32 %v1813, %v2151
        %v2295 = vadd.f32 %v1814, %v2155
        %v2296 = vadd.f32 %v1815, %v2157
        %v2297 = vadd.f32 %v1816, %v2159
        %v2298 = vadd.f32 %v1817, %v2161
        %v2299 = vadd.f32 %v1818, %v2165
        %v2300 = vadd.f32 %v1819, %v2167
        %v2301 = vadd.f32 %v1820, %v2169
        %v2302 = vadd.f32 %v1821, %v2171
        %v2303 = vadd.f32 %v1822, %v2175
        %v2304 = vadd.f32 %v1823, %v2177
        %v2305 = vadd.f32 %v1824, %v2179
        %v2306 = vadd.f32 %v1825, %v2181
        %v2307 = vadd.f32 %v1826, %v2185
        %v2308 = vadd.f32 %v1827, %v2187
        %v2309 = vadd.f32 %v1828, %v2189
        %v2310 = vadd.f32 %v1829, %v2191
        %v2311 = vadd.f32 %v1830, %v2195
        %v2312 = vadd.f32 %v1831, %v2197
        %v2313 = vadd.f32 %v1832, %v2199
        %v2314 = vadd.f32 %v1833, %v2201
        %v2315 = vadd.f32 %v1834, %v2205
        %v2316 = vadd.f32 %v1835, %v2207
        %v2317 = vadd.f32 %v1836, %v2209
        %v2318 = vadd.f32 %v1837, %v2211
        %v2319 = vadd.f32 %v1838, %v2215
        %v2320 = vadd.f32 %v1839, %v2217
        %v2321 = vadd.f32 %v1840, %v2219
        %v2322 = vadd.f32 %v1841, %v2221
        %v2323 = vadd.f32 %v1842, %v2225
        %v2324 = vadd.f32 %v1843, %v2227
        %v2325 = vadd.f32 %v1844, %v2229
        %v2326 = vadd.f32 %v1845, %v2231
        %v2327 = vadd.f32 %v1846, %v2235
        %v2328 = vadd.f32 %v1847, %v2237
        %v2329 = vadd.f32 %v1848, %v2239
        %v2330 = vadd.f32 %v1849, %v2241
        %v2331 = vadd.f32 %v1850, %v2245
        %v2332 = vadd.f32 %v1851, %v2247
        %v2333 = vadd.f32 %v1852, %v2249
        %v2334 = vadd.f32 %v1853, %v2251
        %v2335 = vadd.f32 %v1854, %v2255
        %v2336 = vadd.f32 %v1855, %v2257
        %v2337 = vadd.f32 %v1856, %v2259
        %v2338 = vadd.f32 %v1857, %v2261
        %v2339 = vadd.f32 %v1858, %v2265
        %v2340 = vadd.f32 %v1859, %v2267
        %v2341 = vadd.f32 %v1860, %v2269
        %v2342 = vadd.f32 %v1861, %v2271
        %v2343 = vadd.f32 %v1862, %v2275
        %v2344 = vadd.f32 %v1863, %v2277
        %v2345 = vadd.f32 %v1864, %v2279
        %v2346 = vadd.f32 %v1865, %v2281
        %2347 = vst [vmem:[#allocation2] sm:$0xff] %v2283
        %2348 = vst [vmem:[#allocation2 + $0x8] sm:$0xff] %v2284
        %2349 = vst [vmem:[#allocation2 + $0x10] sm:$0xff] %v2285
        %2350 = vst [vmem:[#allocation2 + $0x18] sm:$0xff] %v2286
        %2351 = vst [vmem:[#allocation2 + $0x20] sm:$0xff] %v2287
        %2352 = vst [vmem:[#allocation2 + $0x28] sm:$0xff] %v2288
        %2353 = vst [vmem:[#allocation2 + $0x30] sm:$0xff] %v2289
        %2354 = vst [vmem:[#allocation2 + $0x38] sm:$0xff] %v2290
        %2355 = vst [vmem:[#allocation2 + $0x40] sm:$0xff] %v2291
        %2356 = vst [vmem:[#allocation2 + $0x48] sm:$0xff] %v2292
        %2357 = vst [vmem:[#allocation2 + $0x50] sm:$0xff] %v2293
        %2358 = vst [vmem:[#allocation2 + $0x58] sm:$0xff] %v2294
        %2359 = vst [vmem:[#allocation2 + $0x60] sm:$0xff] %v2295
        %2360 = vst [vmem:[#allocation2 + $0x68] sm:$0xff] %v2296
        %2361 = vst [vmem:[#allocation2 + $0x70] sm:$0xff] %v2297
        %2362 = vst [vmem:[#allocation2 + $0x78] sm:$0xff] %v2298
        %2363 = vst [vmem:[#allocation2 + $0x80] sm:$0xff] %v2299
        %2364 = vst [vmem:[#allocation2 + $0x88] sm:$0xff] %v2300
        %2365 = vst [vmem:[#allocation2 + $0x90] sm:$0xff] %v2301
        %2366 = vst [vmem:[#allocation2 + $0x98] sm:$0xff] %v2302
        %2367 = vst [vmem:[#allocation2 + $0xa0] sm:$0xff] %v2303
        %2368 = vst [vmem:[#allocation2 + $0xa8] sm:$0xff] %v2304
        %2369 = vst [vmem:[#allocation2 + $0xb0] sm:$0xff] %v2305
        %2370 = vst [vmem:[#allocation2 + $0xb8] sm:$0xff] %v2306
        %2371 = vst [vmem:[#allocation2 + $0xc0] sm:$0xff] %v2307
        %2372 = vst [vmem:[#allocation2 + $0xc8] sm:$0xff] %v2308
        %2373 = vst [vmem:[#allocation2 + $0xd0] sm:$0xff] %v2309
        %2374 = vst [vmem:[#allocation2 + $0xd8] sm:$0xff] %v2310
        %2375 = vst [vmem:[#allocation2 + $0xe0] sm:$0xff] %v2311
        %2376 = vst [vmem:[#allocation2 + $0xe8] sm:$0xff] %v2312
        %2377 = vst [vmem:[#allocation2 + $0xf0] sm:$0xff] %v2313
        %2378 = vst [vmem:[#allocation2 + $0xf8] sm:$0xff] %v2314
        %2379 = vst [vmem:[#allocation2 + $0x100] sm:$0xff] %v2315
        %2380 = vst [vmem:[#allocation2 + $0x108] sm:$0xff] %v2316
        %2381 = vst [vmem:[#allocation2 + $0x110] sm:$0xff] %v2317
        %2382 = vst [vmem:[#allocation2 + $0x118] sm:$0xff] %v2318
        %2383 = vst [vmem:[#allocation2 + $0x120] sm:$0xff] %v2319
        %2384 = vst [vmem:[#allocation2 + $0x128] sm:$0xff] %v2320
        %2385 = vst [vmem:[#allocation2 + $0x130] sm:$0xff] %v2321
        %2386 = vst [vmem:[#allocation2 + $0x138] sm:$0xff] %v2322
        %2387 = vst [vmem:[#allocation2 + $0x140] sm:$0xff] %v2323
        %2388 = vst [vmem:[#allocation2 + $0x148] sm:$0xff] %v2324
        %2389 = vst [vmem:[#allocation2 + $0x150] sm:$0xff] %v2325
        %2390 = vst [vmem:[#allocation2 + $0x158] sm:$0xff] %v2326
        %2391 = vst [vmem:[#allocation2 + $0x160] sm:$0xff] %v2327
        %2392 = vst [vmem:[#allocation2 + $0x168] sm:$0xff] %v2328
        %2393 = vst [vmem:[#allocation2 + $0x170] sm:$0xff] %v2329
        %2394 = vst [vmem:[#allocation2 + $0x178] sm:$0xff] %v2330
        %2395 = vst [vmem:[#allocation2 + $0x180] sm:$0xff] %v2331
        %2396 = vst [vmem:[#allocation2 + $0x188] sm:$0xff] %v2332
        %2397 = vst [vmem:[#allocation2 + $0x190] sm:$0xff] %v2333
        %2398 = vst [vmem:[#allocation2 + $0x198] sm:$0xff] %v2334
        %2399 = vst [vmem:[#allocation2 + $0x1a0] sm:$0xff] %v2335
        %2400 = vst [vmem:[#allocation2 + $0x1a8] sm:$0xff] %v2336
        %2401 = vst [vmem:[#allocation2 + $0x1b0] sm:$0xff] %v2337
        %2402 = vst [vmem:[#allocation2 + $0x1b8] sm:$0xff] %v2338
        %2403 = vst [vmem:[#allocation2 + $0x1c0] sm:$0xff] %v2339
        %2404 = vst [vmem:[#allocation2 + $0x1c8] sm:$0xff] %v2340
        %2405 = vst [vmem:[#allocation2 + $0x1d0] sm:$0xff] %v2341
        %2406 = vst [vmem:[#allocation2 + $0x1d8] sm:$0xff] %v2342
        %2407 = vst [vmem:[#allocation2 + $0x1e0] sm:$0xff] %v2343
        %2408 = vst [vmem:[#allocation2 + $0x1e8] sm:$0xff] %v2344
        %2409 = vst [vmem:[#allocation2 + $0x1f0] sm:$0xff] %v2345
        %2410 = vst [vmem:[#allocation2 + $0x1f8] sm:$0xff] %v2346
        %p2411 = scmp.eq.s32.totalorder %s24, 1
        // Predicated region
        $region49: #{fused_mlp.1} parent=31 // pred_check
          %p2412 = pneg %p2411
        $region50: #{fused_mlp.1} parent=31 // pred_check_branch
          %2414 = sbr.rel (%p2412) target = $region52
        $region51: #{fused_mlp.1} parent=31 // pred_region
          %v2415 = vld [vmem:[#allocation2] sm:$0xff]
          %v2416 = vld [vmem:[#allocation2 + $0x8] sm:$0xff]
          %v2417 = vld [vmem:[#allocation2 + $0x10] sm:$0xff]
          %v2418 = vld [vmem:[#allocation2 + $0x18] sm:$0xff]
          %v2419 = vld [vmem:[#allocation2 + $0x20] sm:$0xff]
          %v2420 = vld [vmem:[#allocation2 + $0x28] sm:$0xff]
          %v2421 = vld [vmem:[#allocation2 + $0x30] sm:$0xff]
          %v2422 = vld [vmem:[#allocation2 + $0x38] sm:$0xff]
          %v2423 = vld [vmem:[#allocation2 + $0x40] sm:$0xff]
          %v2424 = vld [vmem:[#allocation2 + $0x48] sm:$0xff]
          %v2425 = vld [vmem:[#allocation2 + $0x50] sm:$0xff]
          %v2426 = vld [vmem:[#allocation2 + $0x58] sm:$0xff]
          %v2427 = vld [vmem:[#allocation2 + $0x60] sm:$0xff]
          %v2428 = vld [vmem:[#allocation2 + $0x68] sm:$0xff]
          %v2429 = vld [vmem:[#allocation2 + $0x70] sm:$0xff]
          %v2430 = vld [vmem:[#allocation2 + $0x78] sm:$0xff]
          %v2431 = vld [vmem:[#allocation2 + $0x80] sm:$0xff]
          %v2432 = vld [vmem:[#allocation2 + $0x88] sm:$0xff]
          %v2433 = vld [vmem:[#allocation2 + $0x90] sm:$0xff]
          %v2434 = vld [vmem:[#allocation2 + $0x98] sm:$0xff]
          %v2435 = vld [vmem:[#allocation2 + $0xa0] sm:$0xff]
          %v2436 = vld [vmem:[#allocation2 + $0xa8] sm:$0xff]
          %v2437 = vld [vmem:[#allocation2 + $0xb0] sm:$0xff]
          %v2438 = vld [vmem:[#allocation2 + $0xb8] sm:$0xff]
          %v2439 = vld [vmem:[#allocation2 + $0xc0] sm:$0xff]
          %v2440 = vld [vmem:[#allocation2 + $0xc8] sm:$0xff]
          %v2441 = vld [vmem:[#allocation2 + $0xd0] sm:$0xff]
          %v2442 = vld [vmem:[#allocation2 + $0xd8] sm:$0xff]
          %v2443 = vld [vmem:[#allocation2 + $0xe0] sm:$0xff]
          %v2444 = vld [vmem:[#allocation2 + $0xe8] sm:$0xff]
          %v2445 = vld [vmem:[#allocation2 + $0xf0] sm:$0xff]
          %v2446 = vld [vmem:[#allocation2 + $0xf8] sm:$0xff]
          %v2447 = vld [vmem:[#allocation2 + $0x100] sm:$0xff]
          %v2448 = vld [vmem:[#allocation2 + $0x108] sm:$0xff]
          %v2449 = vld [vmem:[#allocation2 + $0x110] sm:$0xff]
          %v2450 = vld [vmem:[#allocation2 + $0x118] sm:$0xff]
          %v2451 = vld [vmem:[#allocation2 + $0x120] sm:$0xff]
          %v2452 = vld [vmem:[#allocation2 + $0x128] sm:$0xff]
          %v2453 = vld [vmem:[#allocation2 + $0x130] sm:$0xff]
          %v2454 = vld [vmem:[#allocation2 + $0x138] sm:$0xff]
          %v2455 = vld [vmem:[#allocation2 + $0x140] sm:$0xff]
          %v2456 = vld [vmem:[#allocation2 + $0x148] sm:$0xff]
          %v2457 = vld [vmem:[#allocation2 + $0x150] sm:$0xff]
          %v2458 = vld [vmem:[#allocation2 + $0x158] sm:$0xff]
          %v2459 = vld [vmem:[#allocation2 + $0x160] sm:$0xff]
          %v2460 = vld [vmem:[#allocation2 + $0x168] sm:$0xff]
          %v2461 = vld [vmem:[#allocation2 + $0x170] sm:$0xff]
          %v2462 = vld [vmem:[#allocation2 + $0x178] sm:$0xff]
          %v2463 = vld [vmem:[#allocation2 + $0x180] sm:$0xff]
          %v2464 = vld [vmem:[#allocation2 + $0x188] sm:$0xff]
          %v2465 = vld [vmem:[#allocation2 + $0x190] sm:$0xff]
          %v2466 = vld [vmem:[#allocation2 + $0x198] sm:$0xff]
          %v2467 = vld [vmem:[#allocation2 + $0x1a0] sm:$0xff]
          %v2468 = vld [vmem:[#allocation2 + $0x1a8] sm:$0xff]
          %v2469 = vld [vmem:[#allocation2 + $0x1b0] sm:$0xff]
          %v2470 = vld [vmem:[#allocation2 + $0x1b8] sm:$0xff]
          %v2471 = vld [vmem:[#allocation2 + $0x1c0] sm:$0xff]
          %v2472 = vld [vmem:[#allocation2 + $0x1c8] sm:$0xff]
          %v2473 = vld [vmem:[#allocation2 + $0x1d0] sm:$0xff]
          %v2474 = vld [vmem:[#allocation2 + $0x1d8] sm:$0xff]
          %v2475 = vld [vmem:[#allocation2 + $0x1e0] sm:$0xff]
          %v2476 = vld [vmem:[#allocation2 + $0x1e8] sm:$0xff]
          %v2477 = vld [vmem:[#allocation2 + $0x1f0] sm:$0xff]
          %v2478 = vld [vmem:[#allocation2 + $0x1f8] sm:$0xff]
          %v2479 = vpack.c.bf16 %v2417, %v2415
          %v2480 = vpack.c.bf16 %v2418, %v2416
          %v2481 = vpack.c.bf16 %v2421, %v2419
          %v2482 = vpack.c.bf16 %v2422, %v2420
          %v2483 = vpack.c.bf16 %v2425, %v2423
          %v2484 = vpack.c.bf16 %v2426, %v2424
          %v2485 = vpack.c.bf16 %v2429, %v2427
          %v2486 = vpack.c.bf16 %v2430, %v2428
          %v2487 = vpack.c.bf16 %v2433, %v2431
          %v2488 = vpack.c.bf16 %v2434, %v2432
          %v2489 = vpack.c.bf16 %v2437, %v2435
          %v2490 = vpack.c.bf16 %v2438, %v2436
          %v2491 = vpack.c.bf16 %v2441, %v2439
          %v2492 = vpack.c.bf16 %v2442, %v2440
          %v2493 = vpack.c.bf16 %v2445, %v2443
          %v2494 = vpack.c.bf16 %v2446, %v2444
          %v2495 = vpack.c.bf16 %v2449, %v2447
          %v2496 = vpack.c.bf16 %v2450, %v2448
          %v2497 = vpack.c.bf16 %v2453, %v2451
          %v2498 = vpack.c.bf16 %v2454, %v2452
          %v2499 = vpack.c.bf16 %v2457, %v2455
          %v2500 = vpack.c.bf16 %v2458, %v2456
          %v2501 = vpack.c.bf16 %v2461, %v2459
          %v2502 = vpack.c.bf16 %v2462, %v2460
          %v2503 = vpack.c.bf16 %v2465, %v2463
          %v2504 = vpack.c.bf16 %v2466, %v2464
          %v2505 = vpack.c.bf16 %v2469, %v2467
          %v2506 = vpack.c.bf16 %v2470, %v2468
          %v2507 = vpack.c.bf16 %v2473, %v2471
          %v2508 = vpack.c.bf16 %v2474, %v2472
          %v2509 = vpack.c.bf16 %v2477, %v2475
          %v2510 = vpack.c.bf16 %v2478, %v2476
          %v2543 = vunpack.c.l.b16 %v2479
          %v2544 = vunpack.c.l.b16 %v2480
          %v2545 = vunpack.c.h.b16 %v2479
          %v2546 = vunpack.c.h.b16 %v2480
          %v2547 = vunpack.c.l.b16 %v2481
          %v2548 = vunpack.c.l.b16 %v2482
          %v2549 = vunpack.c.h.b16 %v2481
          %v2550 = vunpack.c.h.b16 %v2482
          %v2551 = vunpack.c.l.b16 %v2483
          %v2552 = vunpack.c.l.b16 %v2484
          %v2553 = vunpack.c.h.b16 %v2483
          %v2554 = vunpack.c.h.b16 %v2484
          %v2555 = vunpack.c.l.b16 %v2485
          %v2556 = vunpack.c.l.b16 %v2486
          %v2557 = vunpack.c.h.b16 %v2485
          %v2558 = vunpack.c.h.b16 %v2486
          %v2559 = vunpack.c.l.b16 %v2487
          %v2560 = vunpack.c.l.b16 %v2488
          %v2561 = vunpack.c.h.b16 %v2487
          %v2562 = vunpack.c.h.b16 %v2488
          %v2563 = vunpack.c.l.b16 %v2489
          %v2564 = vunpack.c.l.b16 %v2490
          %v2565 = vunpack.c.h.b16 %v2489
          %v2566 = vunpack.c.h.b16 %v2490
          %v2567 = vunpack.c.l.b16 %v2491
          %v2568 = vunpack.c.l.b16 %v2492
          %v2569 = vunpack.c.h.b16 %v2491
          %v2570 = vunpack.c.h.b16 %v2492
          %v2571 = vunpack.c.l.b16 %v2493
          %v2572 = vunpack.c.l.b16 %v2494
          %v2573 = vunpack.c.h.b16 %v2493
          %v2574 = vunpack.c.h.b16 %v2494
          %v2575 = vunpack.c.l.b16 %v2495
          %v2576 = vunpack.c.l.b16 %v2496
          %v2577 = vunpack.c.h.b16 %v2495
          %v2578 = vunpack.c.h.b16 %v2496
          %v2579 = vunpack.c.l.b16 %v2497
          %v2580 = vunpack.c.l.b16 %v2498
          %v2581 = vunpack.c.h.b16 %v2497
          %v2582 = vunpack.c.h.b16 %v2498
          %v2583 = vunpack.c.l.b16 %v2499
          %v2584 = vunpack.c.l.b16 %v2500
          %v2585 = vunpack.c.h.b16 %v2499
          %v2586 = vunpack.c.h.b16 %v2500
          %v2587 = vunpack.c.l.b16 %v2501
          %v2588 = vunpack.c.l.b16 %v2502
          %v2589 = vunpack.c.h.b16 %v2501
          %v2590 = vunpack.c.h.b16 %v2502
          %v2591 = vunpack.c.l.b16 %v2503
          %v2592 = vunpack.c.l.b16 %v2504
          %v2593 = vunpack.c.h.b16 %v2503
          %v2594 = vunpack.c.h.b16 %v2504
          %v2595 = vunpack.c.l.b16 %v2505
          %v2596 = vunpack.c.l.b16 %v2506
          %v2597 = vunpack.c.h.b16 %v2505
          %v2598 = vunpack.c.h.b16 %v2506
          %v2599 = vunpack.c.l.b16 %v2507
          %v2600 = vunpack.c.l.b16 %v2508
          %v2601 = vunpack.c.h.b16 %v2507
          %v2602 = vunpack.c.h.b16 %v2508
          %v2603 = vunpack.c.l.b16 %v2509
          %v2604 = vunpack.c.l.b16 %v2510
          %v2605 = vunpack.c.h.b16 %v2509
          %v2606 = vunpack.c.h.b16 %v2510
          %v2607 = vpack.c.b16 %v2544, %v2543
          %v2608 = vpack.c.b16 %v2546, %v2545
          %v2609 = vpack.c.b16 %v2548, %v2547
          %v2610 = vpack.c.b16 %v2550, %v2549
          %v2611 = vpack.c.b16 %v2552, %v2551
          %v2612 = vpack.c.b16 %v2554, %v2553
          %v2613 = vpack.c.b16 %v2556, %v2555
          %v2614 = vpack.c.b16 %v2558, %v2557
          %v2615 = vpack.c.b16 %v2560, %v2559
          %v2616 = vpack.c.b16 %v2562, %v2561
          %v2617 = vpack.c.b16 %v2564, %v2563
          %v2618 = vpack.c.b16 %v2566, %v2565
          %v2619 = vpack.c.b16 %v2568, %v2567
          %v2620 = vpack.c.b16 %v2570, %v2569
          %v2621 = vpack.c.b16 %v2572, %v2571
          %v2622 = vpack.c.b16 %v2574, %v2573
          %v2623 = vpack.c.b16 %v2576, %v2575
          %v2624 = vpack.c.b16 %v2578, %v2577
          %v2625 = vpack.c.b16 %v2580, %v2579
          %v2626 = vpack.c.b16 %v2582, %v2581
          %v2627 = vpack.c.b16 %v2584, %v2583
          %v2628 = vpack.c.b16 %v2586, %v2585
          %v2629 = vpack.c.b16 %v2588, %v2587
          %v2630 = vpack.c.b16 %v2590, %v2589
          %v2631 = vpack.c.b16 %v2592, %v2591
          %v2632 = vpack.c.b16 %v2594, %v2593
          %v2633 = vpack.c.b16 %v2596, %v2595
          %v2634 = vpack.c.b16 %v2598, %v2597
          %v2635 = vpack.c.b16 %v2600, %v2599
          %v2636 = vpack.c.b16 %v2602, %v2601
          %v2637 = vpack.c.b16 %v2604, %v2603
          %v2638 = vpack.c.b16 %v2606, %v2605
          %2671 = vst [vmem:[#allocation9] sm:$0xff] %v2607
          %2672 = vst [vmem:[#allocation9 + $0x8] sm:$0xff] %v2608
          %2673 = vst [vmem:[#allocation9 + $0x10] sm:$0xff] %v2609
          %2674 = vst [vmem:[#allocation9 + $0x18] sm:$0xff] %v2610
          %2675 = vst [vmem:[#allocation9 + $0x20] sm:$0xff] %v2611
          %2676 = vst [vmem:[#allocation9 + $0x28] sm:$0xff] %v2612
          %2677 = vst [vmem:[#allocation9 + $0x30] sm:$0xff] %v2613
          %2678 = vst [vmem:[#allocation9 + $0x38] sm:$0xff] %v2614
          %2679 = vst [vmem:[#allocation9 + $0x40] sm:$0xff] %v2615
          %2680 = vst [vmem:[#allocation9 + $0x48] sm:$0xff] %v2616
          %2681 = vst [vmem:[#allocation9 + $0x50] sm:$0xff] %v2617
          %2682 = vst [vmem:[#allocation9 + $0x58] sm:$0xff] %v2618
          %2683 = vst [vmem:[#allocation9 + $0x60] sm:$0xff] %v2619
          %2684 = vst [vmem:[#allocation9 + $0x68] sm:$0xff] %v2620
          %2685 = vst [vmem:[#allocation9 + $0x70] sm:$0xff] %v2621
          %2686 = vst [vmem:[#allocation9 + $0x78] sm:$0xff] %v2622
          %2687 = vst [vmem:[#allocation9 + $0x80] sm:$0xff] %v2623
          %2688 = vst [vmem:[#allocation9 + $0x88] sm:$0xff] %v2624
          %2689 = vst [vmem:[#allocation9 + $0x90] sm:$0xff] %v2625
          %2690 = vst [vmem:[#allocation9 + $0x98] sm:$0xff] %v2626
          %2691 = vst [vmem:[#allocation9 + $0xa0] sm:$0xff] %v2627
          %2692 = vst [vmem:[#allocation9 + $0xa8] sm:$0xff] %v2628
          %2693 = vst [vmem:[#allocation9 + $0xb0] sm:$0xff] %v2629
          %2694 = vst [vmem:[#allocation9 + $0xb8] sm:$0xff] %v2630
          %2695 = vst [vmem:[#allocation9 + $0xc0] sm:$0xff] %v2631
          %2696 = vst [vmem:[#allocation9 + $0xc8] sm:$0xff] %v2632
          %2697 = vst [vmem:[#allocation9 + $0xd0] sm:$0xff] %v2633
          %2698 = vst [vmem:[#allocation9 + $0xd8] sm:$0xff] %v2634
          %2699 = vst [vmem:[#allocation9 + $0xe0] sm:$0xff] %v2635
          %2700 = vst [vmem:[#allocation9 + $0xe8] sm:$0xff] %v2636
          %2701 = vst [vmem:[#allocation9 + $0xf0] sm:$0xff] %v2637
          %2702 = vst [vmem:[#allocation9 + $0xf8] sm:$0xff] %v2638
        $region52: #{fused_mlp.1} parent=31 // pred_fallthru
          _
        // Predicated region
        $region53: #{fused_mlp.1} parent=31 // pred_check
          %p2703 = pneg %p127
        $region54: #{fused_mlp.1} parent=31 // pred_check_branch
          %2705 = sbr.rel (%p2703) target = $region56
        $region55: #{fused_mlp.1} parent=31 // pred_region
          %s2706 = smul.u32 32, %s23
          %s2708 = ssub.s32 4096, 4096
          %2709 = vsyncadd [#allocation5], %s2708
          %s2710 = smul.addr %s2706, 2
          %s2711 = smul.addr %s2710, 64
          %s2712 = scalar_lea.hbm %s3, %s2711
          %s2713 = sshll.u32 [#allocation9], 4
          %s2714 = int_to_ptr.vmem [resolvable:$true] %s2713
          %2719 = dma.vmem_to_hbm [thread:$0]  %s2714, 4096, %s2712, [#allocation5], 128, 128, 8
        $region56: #{fused_mlp.1} parent=31 // pred_fallthru
          _
        // Predicated region
        $region57: #{fused_mlp.1} parent=31 // pred_check
          %p2720 = pneg %p127
        $region58: #{fused_mlp.1} parent=31 // pred_check_branch
          %2722 = sbr.rel (%p2720) target = $region60
        $region59: #{fused_mlp.1} parent=31 // pred_region
          %2723 = dma.done [#allocation5], 4096
        $region60: #{fused_mlp.1} parent=31 // pred_fallthru
          _
      $region32: #{fused_mlp.1} parent=5 // pred_fallthru
        _
      %p2724 = scmp.le.s32.totalorder 2, %s14
      // Predicated region
      $region61: #{fused_mlp.1} parent=5 // pred_check
        %p2725 = pneg %p2724
      $region62: #{fused_mlp.1} parent=5 // pred_check_branch
        %2727 = sbr.rel (%p2725) target = $region64
      $region63: #{fused_mlp.1} parent=5 // pred_region
        %s2728 = ssub.s32 %s14, 2
      $region64: #{fused_mlp.1} parent=5 // pred_fallthru
        _
    $region6: #{fused_mlp.1} parent=1 // loop_footer
      %s18 = sadd.s32 1, %s14
    $region7: #{fused_mlp.1} parent=1 // loop_footer_branch
      %13 = sbr.rel target = $region3
    $region8: #{fused_mlp.1} parent=1 // loop_exit
      _
    %2729 = vsyncpa [#allocation4], 1
    %s2730 = scalar_lea.sflag [#allocation4], 1
    %2731 = vsyncpa %s2730, 1
    %2732 = vsyncpa [#allocation7], 1
    %s2733 = scalar_lea.sflag [#allocation7], 1
    %2734 = vsyncpa %s2733, 1
    %2735 = vsyncpa [#allocation5], 1
    %s2736 = scalar_lea.sflag [#allocation5], 1
    %2737 = vsyncpa %s2736, 1

</llo_original>
